<compile_context>
chip_gen: v7x
topology: tpu7x:2x2x1
jax: 0.10.0
libtpu: 0.0.40
codegen_flags: <defaults>
</compile_context>

<pallas_src>
import functools

import numpy as np
import jax
import jax.numpy as jnp
from jax import lax
from jax.experimental import pallas as pl
from jax.experimental.pallas import tpu as pltpu


_FILTER_TAPS = {
    1: [1.0],
    2: [1.0, 1.0],
    3: [1.0, 2.0, 1.0],
    4: [1.0, 3.0, 3.0, 1.0],
    5: [1.0, 4.0, 6.0, 4.0, 1.0],
    6: [1.0, 5.0, 10.0, 10.0, 5.0, 1.0],
    7: [1.0, 6.0, 15.0, 20.0, 15.0, 6.0, 1.0],
}


def get_filter(filt_size=3):
    """2-D binomial filter, identical to the PyTorch helper (used by the reference)."""
    a = np.asarray(_FILTER_TAPS[filt_size], dtype=np.float64)
    filt = a[:, None] * a[None, :]
    filt = filt / filt.sum()
    return jnp.asarray(filt, dtype=jnp.float32)


def _round_up(v, m):
    return ((v + m - 1) // m) * m


def _axis_matrix(size, filt_size, stride, pad_l, pad_r, out_pad=0):
    """(size, out_size+out_pad) matrix folding replication pad + 1-D binomial filter + stride.

    Extra `out_pad` columns are left zero (used to keep the output count a multiple of 8).
    Returns (matrix, out_size).
    """
    taps = np.asarray(_FILTER_TAPS[filt_size], dtype=np.float64)
    taps = taps / taps.sum()
    out_size = (size + pad_l + pad_r - filt_size) // stride + 1
    m = np.zeros((size, out_size + out_pad), dtype=np.float64)
    for j in range(out_size):
        for t in range(filt_size):
            src = min(max(j * stride + t - pad_l, 0), size - 1)  # replication clamp
            m[src, j] += taps[t]
    return m, out_size


def _blurpool_kernel(b_ref, a_ref, x_ref, o_ref, *, wo, precision):
    # b_ref: (W,  Wo_p) horizontal pad+filter+stride matrix (Wo zero-padded to a multiple of 8)
    # a_ref: (H,  Ho)   vertical   pad+filter+stride matrix (column m = taps for output row m)
    # x_ref: (BC, H, W)   input slab of fused N*C channels
    # o_ref: (BC, Ho, Wo) output slab
    bc, h, w = x_ref.shape
    _, ho, _ = o_ref.shape
    wo_p = b_ref.shape[1]

    # Horizontal pass: ONE flat (BC*H, W) x (W, Wo_p) MXU matmul — no per-channel broadcast,
    # large M amortizes MXU fill/drain.
    t = jnp.dot(x_ref[...].reshape(bc * h, w), b_ref[...],
                precision=precision,
                preferred_element_type=jnp.float32)                       # (BC*H, Wo_p)

    # Vertical pass: move H onto the lane dim (minor-dims transpose -> free XLU slot while the
    # MXU is busy), then ONE flat (BC*Wo_p, H) x (H, Ho) MXU matmul. Wo_p % 8 == 0 keeps the
    # collapse sublane-aligned.
    t = jnp.swapaxes(t.reshape(bc, h, wo_p), 1, 2).reshape(bc * wo_p, h)  # (BC*Wo_p, H)
    u = jnp.dot(t, a_ref[...],
                precision=precision,
                preferred_element_type=jnp.float32)                       # (BC*Wo_p, Ho)

    out = jnp.swapaxes(u.reshape(bc, wo_p, ho), 1, 2)                     # (BC, Ho, Wo_p)
    o_ref[...] = out[:, :, :wo].astype(o_ref.dtype)


def _vmem_capacity_bytes():
    """Per-core VMEM capacity (128 MiB v5e/v6e, 64 MiB v7x); conservative fallback."""
    try:
        cap = getattr(pltpu.get_tpu_info(), "vmem_capacity_bytes", None)
        if cap:
            return int(cap)
    except Exception:
        pass
    return 64 * 1024 * 1024


def downsample(x, channels, pad_type='reflect', filt_size=3, stride=2, pad_off=0,
               block_nc=None, vmem_budget_bytes=None,
               precision=lax.Precision.HIGHEST):
    """Forward pass of Downsample. x: (N, C, H, W) -> (N, C, Ho, Wo).

    precision=HIGHEST reproduces the f32 PyTorch conv; for large, MXU-bound spatial sizes
    lax.Precision.HIGH halves the MXU passes and stays well within 1e-5 for this filter.
    """
    N, C, H, W = x.shape
    assert C == channels
    del pad_type  # the PyTorch module always applies ReplicationPad2d, regardless of pad_type
    pad_l = int((filt_size - 1) / 2) + pad_off
    pad_r = int(np.ceil((filt_size - 1) / 2.0)) + pad_off

    # Banded pad+filter+stride matrices; pad Wo to a multiple of 8 with zero columns.
    mv, Ho = _axis_matrix(H, filt_size, stride, pad_l, pad_r)                     # (H, Ho)
    wo_probe = (W + pad_l + pad_r - filt_size) // stride + 1
    Wo_p = _round_up(wo_probe, 8)
    mh, Wo = _axis_matrix(W, filt_size, stride, pad_l, pad_r,
                          out_pad=Wo_p - wo_probe)                                # (W, Wo_p)

    # Feed the MXU in the input dtype (bf16 taps k/2^n are exact); accumulate in f32.
    mat_dtype = x.dtype if jnp.dtype(x.dtype).itemsize < 4 else jnp.float32
    a_mat = jnp.asarray(mv, dtype=mat_dtype)   # (H, Ho)
    b_mat = jnp.asarray(mh, dtype=mat_dtype)   # (W, Wo_p)

    NC = N * C
    x3 = x.reshape(NC, H, W)  # free reshape: merges leading dims only, no data movement

    # --- generation-aware VMEM budgeting --------------------------------------------------
    vmem_cap = _vmem_capacity_bytes()
    vmem_limit = min(int(vmem_cap * 0.75), 112 * 1024 * 1024)   # ~96 MiB v5e/v6e, 48 MiB v7x
    if vmem_budget_bytes is None:
        vmem_budget_bytes = vmem_limit // 2                     # headroom for relayout copies

    # Honest per-slab model: bc-scaled f32 temporaries + (8,128) tile padding + double buffers.
    isz = jnp.dtype(x.dtype).itemsize
    msz = jnp.dtype(mat_dtype).itemsize
    Hs, Wl = _round_up(H, 8), _round_up(W, 128)
    Hos, Wol = _round_up(Ho, 8), _round_up(Wo, 128)
    Hl, Hol = _round_up(H, 128), _round_up(Ho, 128)
    Wps, Wpl = _round_up(Wo_p, 8), _round_up(Wo_p, 128)
    per_chan = (
        2 * Hs * Wl * isz        # x block (double-buffered)
        + 2 * Hos * Wol * isz    # out block (double-buffered)
        + Hs * Wpl * 4           # t            (f32)
        + Wps * Hl * 4           # t transposed (f32)
        + Wps * Hol * 4          # u            (f32)
        + Hos * Wpl * 4          # out f32 before the cast/store
    )
    const_bytes = 2 * (Hs * Hol + _round_up(W, 8) * Wpl) * msz   # A, B (double-buffered)

    if block_nc is None:
        block_nc = max(1, (int(vmem_budget_bytes) - const_bytes) // per_chan)
        if NC >= 2:
            # Keep >= 2 grid steps so the "parallel" axis can shard across v7x's two TensorCores.
            block_nc = min(block_nc, pl.cdiv(NC, 2))
    block_nc = int(min(block_nc, NC))
    num_blocks = pl.cdiv(NC, block_nc)
    # NOTE: if the grid ends up with very few steps and DMA is exposed, pipeline_mode=
    # pl.Buffered(3) on the x spec is the next cheap knob (needs the extra buffer in the model).

    kernel = functools.partial(_blurpool_kernel, wo=Wo, precision=precision)

    out3 = pl.pallas_call(
        kernel,
        out_shape=jax.ShapeDtypeStruct((NC, Ho, Wo), x.dtype),
        grid_spec=pltpu.PrefetchScalarGridSpec(
            num_scalar_prefetch=0,
            grid=(num_blocks,),
            in_specs=[
                pl.BlockSpec((W, Wo_p), lambda i: (0, 0)),            # constant B
                pl.BlockSpec((H, Ho), lambda i: (0, 0)),              # constant A^T
                pl.BlockSpec((block_nc, H, W), lambda i: (i, 0, 0)),  # x slab
            ],
            out_specs=pl.BlockSpec((block_nc, Ho, Wo), lambda i: (i, 0, 0)),
        ),
        compiler_params=pltpu.CompilerParams(
            dimension_semantics=("parallel",),
            vmem_limit_bytes=int(vmem_limit),
        ),
    )(b_mat, a_mat, x3)

    return out3.reshape(N, C, Ho, Wo)


def downsample_ref(x, filt_size=3, stride=2, pad_off=0):
    """Pure-JAX reference: replication pad + depthwise conv, matching the PyTorch module."""
    N, C, H, W = x.shape
    pad_l = int((filt_size - 1) / 2) + pad_off
    pad_r = int(np.ceil((filt_size - 1) / 2.0)) + pad_off
    xp = jnp.pad(x, ((0, 0), (0, 0), (pad_l, pad_r), (pad_l, pad_r)), mode='edge')
    filt = get_filter(filt_size)
    w = jnp.broadcast_to(filt[None, None, :, :], (C, 1, filt_size, filt_size))
    return lax.conv_general_dilated(
        xp, w, (stride, stride), 'VALID',
        dimension_numbers=('NCHW', 'OIHW', 'NCHW'),
        feature_group_count=C,
        precision=lax.Precision.HIGHEST)


if __name__ == "__main__":
    key = jax.random.PRNGKey(0)
    N, C, H, W = 2, 4, 16, 16
    x = jax.random.normal(key, (N, C, H, W), dtype=jnp.float32)

    # Default path (auto slab size, >=2 grid steps).
    out = jax.block_until_ready(downsample(x, channels=C))
    ref = downsample_ref(x)
    assert out.shape == (N, C, 8, 8), out.shape
    np.testing.assert_allclose(np.asarray(out), np.asarray(ref), rtol=1e-5, atol=1e-5)

    # Multi-step grid with a partial final block (NC=8, slabs of 3).
    out_tiled = jax.block_until_ready(downsample(x, channels=C, block_nc=3))
    np.testing.assert_allclose(np.asarray(out_tiled), np.asarray(ref), rtol=1e-5, atol=1e-5)

    # Non-square input with odd width exercises the far-edge replication clamp, the Wo->Wo_p
    # zero-padding and the final lane slice (Wo = 7).
    x_nsq = jax.random.normal(jax.random.PRNGKey(0), (1, 3, 16, 13), dtype=jnp.float32)
    out_nsq = jax.block_until_ready(downsample(x_nsq, channels=3))
    ref_nsq = downsample_ref(x_nsq)
    np.testing.assert_allclose(np.asarray(out_nsq), np.asarray(ref_nsq), rtol=1e-5, atol=1e-5)

    # filt_size == 1 path (pure strided subsample) goes through the same kernel and is exact.
    out_f1 = jax.block_until_ready(downsample(x, channels=C, filt_size=1))
    np.testing.assert_allclose(np.asarray(out_f1), np.asarray(x[:, :, ::2, ::2]),
                               rtol=1e-6, atol=1e-6)

    # bf16 inputs feed the MXU directly (no f32 upcast copy).
    x_bf = x.astype(jnp.bfloat16)
    out_bf = jax.block_until_ready(downsample(x_bf, channels=C))
    ref_bf = downsample_ref(x_bf.astype(jnp.float32)).astype(jnp.bfloat16)
    np.testing.assert_allclose(np.asarray(out_bf, dtype=np.float32),
                               np.asarray(ref_bf, dtype=np.float32), rtol=2e-2, atol=2e-2)

    print("KERNEL_OK")
</pallas_src>

<mosaic_0001>
module attributes {stable_mosaic.version = 11 : i64} {
  func.func @_blurpool_kernel(%arg0: i32, %arg1: memref<16x8xf32, #tpu.memory_space<vmem>>, %arg2: memref<16x8xf32, #tpu.memory_space<vmem>>, %arg3: memref<4x16x16xf32, #tpu.memory_space<vmem>>, %arg4: memref<4x8x8xf32, #tpu.memory_space<vmem>>) attributes {dimension_semantics = [#tpu.dimension_semantics<parallel>], iteration_bounds = array<i64: 2>, scalar_prefetch = 0 : i64, scratch_operands = 0 : i64, tpu.core_type = #tpu.core_type<tc>, window_params = [{pipeline_mode = #tpu.pipeline_mode<synchronous>, transform_indices = @transform_0, window_bounds = array<i64: 16, 8>}, {pipeline_mode = #tpu.pipeline_mode<synchronous>, transform_indices = @transform_1, window_bounds = array<i64: 16, 8>}, {transform_indices = @transform_2, window_bounds = array<i64: 4, 16, 16>}, {transform_indices = @transform_3, window_bounds = array<i64: 4, 8, 8>}]} {
    %c0 = arith.constant 0 : index
    %c0_0 = arith.constant 0 : index
    %c0_1 = arith.constant 0 : index
    %0 = vector.load %arg3[%c0, %c0_0, %c0_1] : memref<4x16x16xf32, #tpu.memory_space<vmem>>, vector<4x16x16xf32>
    %1 = vector.shape_cast %0 : vector<4x16x16xf32> to vector<64x16xf32>
    %c0_2 = arith.constant 0 : index
    %c0_3 = arith.constant 0 : index
    %2 = vector.load %arg1[%c0_2, %c0_3] : memref<16x8xf32, #tpu.memory_space<vmem>>, vector<16x8xf32>
    %cst = arith.constant dense<0.000000e+00> : vector<64x8xf32>
    %3 = tpu.matmul %1, %2, %cst {dimension_numbers = #tpu.dot_dimension_numbers<[1], [0], [0], [1], [0, 0, 1, 1], [], []>, precision = #tpu.contract_precision<fp32>} : vector<64x16xf32>, vector<16x8xf32>, vector<64x8xf32> -> vector<64x8xf32>
    %4 = vector.shape_cast %3 : vector<64x8xf32> to vector<4x16x8xf32>
    %5 = tpu.transpose %4, [0, 2, 1] : vector<4x16x8xf32> -> vector<4x8x16xf32>
    %6 = vector.shape_cast %5 : vector<4x8x16xf32> to vector<32x16xf32>
    %c0_4 = arith.constant 0 : index
    %c0_5 = arith.constant 0 : index
    %7 = vector.load %arg2[%c0_4, %c0_5] : memref<16x8xf32, #tpu.memory_space<vmem>>, vector<16x8xf32>
    %cst_6 = arith.constant dense<0.000000e+00> : vector<32x8xf32>
    %8 = tpu.matmul %6, %7, %cst_6 {dimension_numbers = #tpu.dot_dimension_numbers<[1], [0], [0], [1], [0, 0, 1, 1], [], []>, precision = #tpu.contract_precision<fp32>} : vector<32x16xf32>, vector<16x8xf32>, vector<32x8xf32> -> vector<32x8xf32>
    %9 = vector.shape_cast %8 : vector<32x8xf32> to vector<4x8x8xf32>
    %10 = tpu.transpose %9, [0, 2, 1] : vector<4x8x8xf32> -> vector<4x8x8xf32>
    %c0_7 = arith.constant 0 : index
    %c0_8 = arith.constant 0 : index
    %c0_9 = arith.constant 0 : index
    %11 = vector.load %arg4[%c0_7, %c0_8, %c0_9] : memref<4x8x8xf32, #tpu.memory_space<vmem>>, vector<4x8x8xf32>
    tpu.vector_store %arg4[%c0_7, %c0_8, %c0_9], %10 {strides = array<i32>} : memref<4x8x8xf32, #tpu.memory_space<vmem>>, vector<4x8x8xf32>,
    return
  }
  func.func @transform_0(%arg0: i32) -> (i32, i32) {
    %c0_i32 = arith.constant 0 : i32
    %c0_i32_0 = arith.constant 0 : i32
    %c0_i32_1 = arith.constant 0 : i32
    return %c0_i32, %c0_i32_0 : i32, i32
  }
  func.func @transform_1(%arg0: i32) -> (i32, i32) {
    %c0_i32 = arith.constant 0 : i32
    %c0_i32_0 = arith.constant 0 : i32
    %c0_i32_1 = arith.constant 0 : i32
    return %c0_i32, %c0_i32_0 : i32, i32
  }
  func.func @transform_2(%arg0: i32) -> (i32, i32, i32) {
    %c0_i32 = arith.constant 0 : i32
    %c0_i32_0 = arith.constant 0 : i32
    %c0_i32_1 = arith.constant 0 : i32
    return %arg0, %c0_i32, %c0_i32_0 : i32, i32, i32
  }
  func.func @transform_3(%arg0: i32) -> (i32, i32, i32) {
    %c0_i32 = arith.constant 0 : i32
    %c0_i32_0 = arith.constant 0 : i32
    %c0_i32_1 = arith.constant 0 : i32
    return %arg0, %c0_i32, %c0_i32_0 : i32, i32, i32
  }
}

</mosaic_0001>

<llo_original>
// kernel: tpu_custom_call.1
$region0: #{tpu_custom_call.1}
  #allocation0 [shape = 'u32[]', space=smem, size = 0x4, offset = 0x4, fixed_abs, tag = 'smem constant byte address 0x4 - core index']
  #allocation1 [shape = 'u32[144,128]{1,0:T(1,128)}', space=vmem, size = 0x12000, scoped, tag = 'internal scratch']
  %s0 = inlined_call_operand.vmem [shape: f32[16,8], index: 0, kind: input, shape index: {}]
  %s1 = inlined_call_operand.vmem [shape: f32[16,8], index: 1, kind: input, shape index: {}]
  %s2 = inlined_call_operand.hbm [shape: f32[8,16,16], index: 2, kind: input, shape index: {}]
  %s3 = inlined_call_operand.hbm [shape: f32[8,8,8], index: 3, kind: output, shape index: {}]
  %s4 = sld [smem:[#allocation0]]
  $region49: #{tpu_custom_call.1} parent=0
    _
  %s6 = ssub.s32 1, %s4
  %s7 = scalar_select 0, %s6, %s4
  $region1: #{tpu_custom_call.1} parent=0
    #allocation2 [shape = 'u8[65536]{0}', space=vmem, size = 0x10000, scoped, tag = 'input window, operand 2']
    #allocation3 [shape = 's32[2]{0}', space=sflag, size = 0x8, scoped, tag = 'scoped memory for tpu_custom_call.1']
    #allocation4 [shape = 's32[2]{0}', space=sflag, size = 0x8, scoped, tag = 'scoped memory for tpu_custom_call.1']
    #allocation5 [shape = 'u8[32768]{0}', space=vmem, size = 0x8000, scoped, tag = 'output window, operand 0']
    %8 = vsyncpa [#allocation3], 0
    %s9 = scalar_lea.sflag [#allocation3], 1
    %10 = vsyncpa %s9, 0
    %11 = vsyncpa [#allocation4], 0
    %s12 = scalar_lea.sflag [#allocation4], 1
    %13 = vsyncpa %s12, 0
    loop: start=0, step=1, limit=4
    $region2: #{tpu_custom_call.1} parent=1 // loop_pre_header
      _
    $region3: #{tpu_custom_call.1} parent=1 // loop_header
      %s15 = sphi 0, %s19
      %p16 = scmp.ge.s32.totalorder %s15, 4
      %s23 = sphi 0, %s23
      %s25 = sphi 0, %s23
      %s26 = sphi 0, %s25
      %s40 = sphi 0, %s26
      %s44 = sphi 0, %s44
      %s46 = sphi 0, %s44
      %s47 = sphi 0, %s46
      %s61 = sphi 0, %s47
      %s67 = sphi 0, %s69
      %s70 = sphi 0, %s67
      %s71 = sphi 0, %s70
      %s87 = sphi 0, %s71
      %s93 = sphi 0, %s95
      %s96 = sphi 0, %s93
      %s97 = sphi 0, %s96
      %s113 = sphi 0, %s97
    $region4: #{tpu_custom_call.1} parent=1 // loop_header_branch
      %18 = sbr.rel (%p16) target = $region8
    $region5: #{tpu_custom_call.1} parent=1 // loop_body
      %s20 = ssub.s32 %s15, 1
      %s21 = ssub.s32 %s15, 2
      %s22 = sadd.s32 %s15, 1
      %s24 = sadd.s32 %s23, 1
      %p27 = scmp.eq.s32.totalorder %s15, 1
      %p28 = scmp.ne.s32.totalorder %s23, %s25
      %p29 = scmp.eq.s32.totalorder %s15, 0
      %p30 = por %p28, %p29
      %p31 = scmp.ne.s32.totalorder %s23, %s25
      %p32 = scmp.eq.s32.totalorder %s20, 1
      %p33 = por %p31, %p32
      %p34 = scmp.ne.s32.totalorder %s25, %s26
      %p35 = scmp.eq.s32.totalorder %s20, 0
      %p36 = por %p34, %p35
      %p37 = scmp.ne.s32.totalorder %s25, %s26
      %p38 = scmp.eq.s32.totalorder %s21, 1
      %p39 = por %p37, %p38
      %p41 = scmp.ne.s32.totalorder %s26, %s40
      %p42 = scmp.eq.s32.totalorder %s21, 0
      %p43 = por %p41, %p42
      %s45 = sadd.s32 %s44, 1
      %p48 = scmp.eq.s32.totalorder %s15, 1
      %p49 = scmp.ne.s32.totalorder %s44, %s46
      %p50 = scmp.eq.s32.totalorder %s15, 0
      %p51 = por %p49, %p50
      %p52 = scmp.ne.s32.totalorder %s44, %s46
      %p53 = scmp.eq.s32.totalorder %s20, 1
      %p54 = por %p52, %p53
      %p55 = scmp.ne.s32.totalorder %s46, %s47
      %p56 = scmp.eq.s32.totalorder %s20, 0
      %p57 = por %p55, %p56
      %p58 = scmp.ne.s32.totalorder %s46, %s47
      %p59 = scmp.eq.s32.totalorder %s21, 1
      %p60 = por %p58, %p59
      %p62 = scmp.ne.s32.totalorder %s47, %s61
      %p63 = scmp.eq.s32.totalorder %s21, 0
      %p64 = por %p62, %p63
      %s65 = ssub.s32 %s15, %s22
      %p66 = scmp.eq.s32.totalorder %s65, 0
      %s68 = sadd.s32 %s67, 1
      %s69 = scalar_select %p66, %s67, %s68
      %p72 = pneg %p66
      %p73 = scmp.eq.s32.totalorder %s15, 1
      %p74 = por %p72, %p73
      %p75 = scmp.ne.s32.totalorder %s67, %s70
      %p76 = scmp.eq.s32.totalorder %s15, 0
      %p77 = por %p75, %p76
      %p78 = scmp.ne.s32.totalorder %s67, %s70
      %p79 = scmp.eq.s32.totalorder %s20, 1
      %p80 = por %p78, %p79
      %p81 = scmp.ne.s32.totalorder %s70, %s71
      %p82 = scmp.eq.s32.totalorder %s20, 0
      %p83 = por %p81, %p82
      %p84 = scmp.ne.s32.totalorder %s70, %s71
      %p85 = scmp.eq.s32.totalorder %s21, 1
      %p86 = por %p84, %p85
      %p88 = scmp.ne.s32.totalorder %s71, %s87
      %p89 = scmp.eq.s32.totalorder %s21, 0
      %p90 = por %p88, %p89
      %s91 = ssub.s32 %s15, %s22
      %p92 = scmp.eq.s32.totalorder %s91, 0
      %s94 = sadd.s32 %s93, 1
      %s95 = scalar_select %p92, %s93, %s94
      %p98 = pneg %p92
      %p99 = scmp.eq.s32.totalorder %s15, 1
      %p100 = por %p98, %p99
      %p101 = scmp.ne.s32.totalorder %s93, %s96
      %p102 = scmp.eq.s32.totalorder %s15, 0
      %p103 = por %p101, %p102
      %p104 = scmp.ne.s32.totalorder %s93, %s96
      %p105 = scmp.eq.s32.totalorder %s20, 1
      %p106 = por %p104, %p105
      %p107 = scmp.ne.s32.totalorder %s96, %s97
      %p108 = scmp.eq.s32.totalorder %s20, 0
      %p109 = por %p107, %p108
      %p110 = scmp.ne.s32.totalorder %s96, %s97
      %p111 = scmp.eq.s32.totalorder %s21, 1
      %p112 = por %p110, %p111
      %p114 = scmp.ne.s32.totalorder %s97, %s113
      %p115 = scmp.eq.s32.totalorder %s21, 0
      %p116 = por %p114, %p115
      %p117 = scmp.le.s32.totalorder 1, %s15
      %p118 = scmp.lt.s32.totalorder %s15, 3
      %p119 = pnand %p117, %p118
      %p120 = pneg %p119
      // Predicated region
      $region9: #{tpu_custom_call.1} parent=5 // pred_check
        _
      $region10: #{tpu_custom_call.1} parent=5 // pred_check_branch
        %122 = sbr.rel (%p119) target = $region12
      $region11: #{tpu_custom_call.1} parent=5 // pred_region
        %s123 = ssub.s32 %s15, 1
        // Predicated region
        $region13: #{tpu_custom_call.1} parent=11 // pred_check
          %p124 = pneg %p36
        $region14: #{tpu_custom_call.1} parent=11 // pred_check_branch
          %126 = sbr.rel (%p124) target = $region16
        $region15: #{tpu_custom_call.1} parent=11 // pred_region
          _
        $region16: #{tpu_custom_call.1} parent=11 // pred_fallthru
          _
        // Predicated region
        $region17: #{tpu_custom_call.1} parent=11 // pred_check
          %p127 = pneg %p57
        $region18: #{tpu_custom_call.1} parent=11 // pred_check_branch
          %129 = sbr.rel (%p127) target = $region20
        $region19: #{tpu_custom_call.1} parent=11 // pred_region
          _
        $region20: #{tpu_custom_call.1} parent=11 // pred_fallthru
          _
      $region12: #{tpu_custom_call.1} parent=5 // pred_fallthru
        _
      %p130 = scmp.lt.s32.totalorder %s15, 2
      // Predicated region
      $region21: #{tpu_custom_call.1} parent=5 // pred_check
        %p131 = pneg %p130
      $region22: #{tpu_custom_call.1} parent=5 // pred_check_branch
        %133 = sbr.rel (%p131) target = $region24
      $region23: #{tpu_custom_call.1} parent=5 // pred_region
        // Predicated region
        $region25: #{tpu_custom_call.1} parent=23 // pred_check
          %p134 = pneg %p77
        $region26: #{tpu_custom_call.1} parent=23 // pred_check_branch
          %136 = sbr.rel (%p134) target = $region28
        $region27: #{tpu_custom_call.1} parent=23 // pred_region
          %s137 = sand.u32 %s67, 1
          %s138 = scalar_lea.sflag [#allocation3], %s137
          %s139 = sand.u32 %s67, 1
          %s140 = smul.addr %s139, 64
          %s141 = scalar_lea.vmem [#allocation2], %s140
          %s142 = smul.u32 4, %s15
          %s144 = ssub.s32 1024, 1024
          %145 = vsyncadd %s138, %s144
          %s146 = smul.addr %s142, 2
          %s147 = smul.addr %s146, 128
          %s148 = scalar_lea.hbm %s2, %s147
          %s149 = sshll.u32 %s141, 4
          %s150 = int_to_ptr.vmem [resolvable:$true] %s149
          %155 = dma.hbm_to_vmem [thread:$0]  %s148, 1024, %s150, %s138, 128, 128, 8
        $region28: #{tpu_custom_call.1} parent=23 // pred_fallthru
          _
      $region24: #{tpu_custom_call.1} parent=5 // pred_fallthru
        _
      %p156 = scmp.le.s32.totalorder 1, %s15
      %p157 = scmp.lt.s32.totalorder %s15, 3
      %p158 = pnand %p156, %p157
      %p159 = pneg %p158
      // Predicated region
      $region29: #{tpu_custom_call.1} parent=5 // pred_check
        _
      $region30: #{tpu_custom_call.1} parent=5 // pred_check_branch
        %161 = sbr.rel (%p158) target = $region32
      $region31: #{tpu_custom_call.1} parent=5 // pred_region
        %s162 = ssub.s32 %s15, 1
        %s163 = sand.u32 %s70, 1
        %s164 = scalar_lea.sflag [#allocation3], %s163
        %s165 = sand.u32 %s70, 1
        %s166 = smul.addr %s165, 64
        %s167 = scalar_lea.vmem [#allocation2], %s166
        // Predicated region
        $region33: #{tpu_custom_call.1} parent=31 // pred_check
          %p168 = pneg %p83
        $region34: #{tpu_custom_call.1} parent=31 // pred_check_branch
          %170 = sbr.rel (%p168) target = $region36
        $region35: #{tpu_custom_call.1} parent=31 // pred_region
          %171 = dma.done %s164, 1024
        $region36: #{tpu_custom_call.1} parent=31 // pred_fallthru
          _
        %p172 = pneg %p36
        %p173 = pneg %p33
        %p174 = pneg %p57
        %p175 = pneg %p54
        %s176 = sand.u32 %s70, 1
        %s177 = scalar_lea.sflag [#allocation3], %s176
        %s178 = sand.u32 %s70, 1
        %s179 = smul.addr %s178, 64
        %s180 = scalar_lea.vmem [#allocation2], %s179
        %p181 = pneg %p83
        %p182 = pneg %p80
        %p183 = pneg %p109
        %p184 = pneg %p106
        %s185 = sand.u32 %s96, 1
        %s186 = scalar_lea.sflag [#allocation4], %s185
        %s187 = sand.u32 %s96, 1
        %s188 = smul.addr %s187, 32
        %s189 = scalar_lea.vmem [#allocation5], %s188
        %s190 = smul.u32 4, %s20
        %s191 = smul.u32 4, %s20
        %v192 = vld [vmem:[%s167] sm:$0xff]
        %v193 = vld [vmem:[%s167 + $0x8] sm:$0xff]
        %v194 = vld [vmem:[%s167 + $0x10] sm:$0xff]
        %v195 = vld [vmem:[%s167 + $0x18] sm:$0xff]
        %v196 = vld [vmem:[%s167 + $0x20] sm:$0xff]
        %v197 = vld [vmem:[%s167 + $0x28] sm:$0xff]
        %v198 = vld [vmem:[%s167 + $0x30] sm:$0xff]
        %v199 = vld [vmem:[%s167 + $0x38] sm:$0xff]
        %v200 = vld [vmem:[%s0] sm:$0xff]
        %v201 = vld [vmem:[%s0 + $0x8] sm:$0xff]
        %vm202 = vcmask 130048
        %v204 = vsel %vm202, %v192, 0
        %v207 = vsel %vm202, %v193, 0
        %v210 = vsel %vm202, %v194, 0
        %v213 = vsel %vm202, %v195, 0
        %v216 = vsel %vm202, %v196, 0
        %v219 = vsel %vm202, %v197, 0
        %v222 = vsel %vm202, %v198, 0
        %v225 = vsel %vm202, %v199, 0
        %227 = vmatprep.subr.mxu0 0.0
        %v228 = vand.u32 %v200, 4294901760
        %229 = vmatpush1.msra.mxu0 %v228
        %230 = vmatprep.subr.mxu0 0.0
        %v231 = vand.u32 %v201, 4294901760
        %232 = vmatpush1.msra.mxu0 %v231
        %233 = vmatprep.subr.mxu0 0.0
        %234 = vmatpush1.msra.mxu0 0.0
        %235 = vmatprep.subr.mxu0 0.0
        %236 = vmatpush1.msra.mxu0 0.0
        %237 = vmatprep.subr.mxu0 0.0
        %238 = vmatpush1.msra.mxu0 0.0
        %239 = vmatprep.subr.mxu0 0.0
        %240 = vmatpush1.msra.mxu0 0.0
        %241 = vmatprep.subr.mxu0 0.0
        %242 = vmatpush1.msra.mxu0 0.0
        %243 = vmatprep.subr.mxu0 0.0
        %244 = vmatpush1.msra.mxu0 0.0
        %245 = vmatprep.subr.mxu0 0.0
        %246 = vmatpush1.msra.mxu0 0.0
        %247 = vmatprep.subr.mxu0 0.0
        %248 = vmatpush1.msra.mxu0 0.0
        %249 = vmatprep.subr.mxu0 0.0
        %250 = vmatpush1.msra.mxu0 0.0
        %251 = vmatprep.subr.mxu0 0.0
        %252 = vmatpush1.msra.mxu0 0.0
        %253 = vmatprep.subr.mxu0 0.0
        %254 = vmatpush1.msra.mxu0 0.0
        %255 = vmatprep.subr.mxu0 0.0
        %256 = vmatpush1.msra.mxu0 0.0
        %257 = vmatprep.subr.mxu0 0.0
        %258 = vmatpush1.msra.mxu0 0.0
        %259 = vmatprep.subr.mxu0 0.0
        %260 = vmatpush1.msra.mxu0 0.0
        %261 = vmatprep.subr.mxu0 0.0
        %262 = vmatpush1.msra.mxu0 0.0
        %263 = vmatprep.subr.mxu0 0.0
        %264 = vmatpush1.msra.mxu0 0.0
        %265 = vmatprep.subr.mxu0 0.0
        %266 = vmatpush1.msra.mxu0 0.0
        %267 = vmatprep.subr.mxu0 0.0
        %268 = vmatpush1.msra.mxu0 0.0
        %269 = vmatprep.subr.mxu0 0.0
        %270 = vmatpush1.msra.mxu0 0.0
        %271 = vmatprep.subr.mxu0 0.0
        %272 = vmatpush1.msra.mxu0 0.0
        %273 = vmatprep.subr.mxu0 0.0
        %274 = vmatpush1.msra.mxu0 0.0
        %275 = vmatprep.subr.mxu0 0.0
        %276 = vmatpush1.msra.mxu0 0.0
        %277 = vmatprep.subr.mxu0 0.0
        %278 = vmatpush1.msra.mxu0 0.0
        %279 = vmatprep.subr.mxu0 0.0
        %280 = vmatpush1.msra.mxu0 0.0
        %281 = vmatprep.subr.mxu0 0.0
        %282 = vmatpush1.msra.mxu0 0.0
        %283 = vmatprep.subr.mxu0 0.0
        %284 = vmatpush1.msra.mxu0 0.0
        %285 = vmatprep.subr.mxu0 0.0
        %286 = vmatpush1.msra.mxu0 0.0
        %287 = vmatprep.subr.mxu0 0.0
        %288 = vmatpush1.msra.mxu0 0.0
        %289 = vmatprep.subr.mxu0 0.0
        %290 = vmatpush1.msra.mxu0 0.0
        %291 = vmatprep.subr.mxu0 0.0
        %292 = vmatpush1.msra.mxu0 0.0
        %293 = vmatprep.mubr.f32.mxu0 0.0
        %v294 = vand.u32 %v204, 4294901760
        %v295 = vsub.f32 %v204, %v294
        %v296 = vand.u32 %v295, 4294901760
        %v297 = vsub.f32 %v295, %v296
        %v298 = vand.u32 %v297, 4294901760
        %299 = vmatmul.mubr.f32.gmra.mrb[0].mxu0 %v298
        %v300 = vpop.f32.mrb[0].mxu0
        %v301 = vadd.f32 0.0, %v300
        %v302 = vpop.f32.mrb[0].mxu0
        %303 = vmatprep.mubr.f32.mxu0 0.0
        %v304 = vand.u32 %v207, 4294901760
        %v305 = vsub.f32 %v207, %v304
        %v306 = vand.u32 %v305, 4294901760
        %v307 = vsub.f32 %v305, %v306
        %v308 = vand.u32 %v307, 4294901760
        %309 = vmatmul.mubr.f32.gmra.mrb[0].mxu0 %v308
        %v310 = vpop.f32.mrb[0].mxu0
        %v311 = vadd.f32 0.0, %v310
        %v312 = vpop.f32.mrb[0].mxu0
        %313 = vmatprep.mubr.f32.mxu0 0.0
        %v314 = vand.u32 %v210, 4294901760
        %v315 = vsub.f32 %v210, %v314
        %v316 = vand.u32 %v315, 4294901760
        %v317 = vsub.f32 %v315, %v316
        %v318 = vand.u32 %v317, 4294901760
        %319 = vmatmul.mubr.f32.gmra.mrb[0].mxu0 %v318
        %v320 = vpop.f32.mrb[0].mxu0
        %v321 = vadd.f32 0.0, %v320
        %v322 = vpop.f32.mrb[0].mxu0
        %323 = vmatprep.mubr.f32.mxu0 0.0
        %v324 = vand.u32 %v213, 4294901760
        %v325 = vsub.f32 %v213, %v324
        %v326 = vand.u32 %v325, 4294901760
        %v327 = vsub.f32 %v325, %v326
        %v328 = vand.u32 %v327, 4294901760
        %329 = vmatmul.mubr.f32.gmra.mrb[0].mxu0 %v328
        %v330 = vpop.f32.mrb[0].mxu0
        %v331 = vadd.f32 0.0, %v330
        %v332 = vpop.f32.mrb[0].mxu0
        %333 = vmatprep.mubr.f32.mxu0 0.0
        %v334 = vand.u32 %v216, 4294901760
        %v335 = vsub.f32 %v216, %v334
        %v336 = vand.u32 %v335, 4294901760
        %v337 = vsub.f32 %v335, %v336
        %v338 = vand.u32 %v337, 4294901760
        %339 = vmatmul.mubr.f32.gmra.mrb[0].mxu0 %v338
        %v340 = vpop.f32.mrb[0].mxu0
        %v341 = vadd.f32 0.0, %v340
        %v342 = vpop.f32.mrb[0].mxu0
        %343 = vmatprep.mubr.f32.mxu0 0.0
        %v344 = vand.u32 %v219, 4294901760
        %v345 = vsub.f32 %v219, %v344
        %v346 = vand.u32 %v345, 4294901760
        %v347 = vsub.f32 %v345, %v346
        %v348 = vand.u32 %v347, 4294901760
        %349 = vmatmul.mubr.f32.gmra.mrb[0].mxu0 %v348
        %v350 = vpop.f32.mrb[0].mxu0
        %v351 = vadd.f32 0.0, %v350
        %v352 = vpop.f32.mrb[0].mxu0
        %353 = vmatprep.mubr.f32.mxu0 0.0
        %v354 = vand.u32 %v222, 4294901760
        %v355 = vsub.f32 %v222, %v354
        %v356 = vand.u32 %v355, 4294901760
        %v357 = vsub.f32 %v355, %v356
        %v358 = vand.u32 %v357, 4294901760
        %359 = vmatmul.mubr.f32.gmra.mrb[0].mxu0 %v358
        %v360 = vpop.f32.mrb[0].mxu0
        %v361 = vadd.f32 0.0, %v360
        %v362 = vpop.f32.mrb[0].mxu0
        %363 = vmatprep.mubr.f32.mxu0 0.0
        %v364 = vand.u32 %v225, 4294901760
        %v365 = vsub.f32 %v225, %v364
        %v366 = vand.u32 %v365, 4294901760
        %v367 = vsub.f32 %v365, %v366
        %v368 = vand.u32 %v367, 4294901760
        %369 = vmatmul.mubr.f32.gmra.mrb[0].mxu0 %v368
        %v370 = vpop.f32.mrb[0].mxu0
        %v371 = vadd.f32 0.0, %v370
        %v372 = vpop.f32.mrb[0].mxu0
        %373 = vdwg.mxu0
        %374 = vmatprep.subr.mxu0 0.0
        %v375 = vand.u32 %v200, 4294901760
        %v376 = vsub.f32 %v200, %v375
        %v377 = vand.u32 %v376, 4294901760
        %v378 = vsub.f32 %v376, %v377
        %v379 = vand.u32 %v378, 4294901760
        %380 = vmatpush1.msra.mxu0 %v379
        %381 = vmatprep.subr.mxu0 0.0
        %v382 = vand.u32 %v201, 4294901760
        %v383 = vsub.f32 %v201, %v382
        %v384 = vand.u32 %v383, 4294901760
        %v385 = vsub.f32 %v383, %v384
        %v386 = vand.u32 %v385, 4294901760
        %387 = vmatpush1.msra.mxu0 %v386
        %388 = vmatprep.subr.mxu0 0.0
        %389 = vmatpush1.msra.mxu0 0.0
        %390 = vmatprep.subr.mxu0 0.0
        %391 = vmatpush1.msra.mxu0 0.0
        %392 = vmatprep.subr.mxu0 0.0
        %393 = vmatpush1.msra.mxu0 0.0
        %394 = vmatprep.subr.mxu0 0.0
        %395 = vmatpush1.msra.mxu0 0.0
        %396 = vmatprep.subr.mxu0 0.0
        %397 = vmatpush1.msra.mxu0 0.0
        %398 = vmatprep.subr.mxu0 0.0
        %399 = vmatpush1.msra.mxu0 0.0
        %400 = vmatprep.subr.mxu0 0.0
        %401 = vmatpush1.msra.mxu0 0.0
        %402 = vmatprep.subr.mxu0 0.0
        %403 = vmatpush1.msra.mxu0 0.0
        %404 = vmatprep.subr.mxu0 0.0
        %405 = vmatpush1.msra.mxu0 0.0
        %406 = vmatprep.subr.mxu0 0.0
        %407 = vmatpush1.msra.mxu0 0.0
        %408 = vmatprep.subr.mxu0 0.0
        %409 = vmatpush1.msra.mxu0 0.0
        %410 = vmatprep.subr.mxu0 0.0
        %411 = vmatpush1.msra.mxu0 0.0
        %412 = vmatprep.subr.mxu0 0.0
        %413 = vmatpush1.msra.mxu0 0.0
        %414 = vmatprep.subr.mxu0 0.0
        %415 = vmatpush1.msra.mxu0 0.0
        %416 = vmatprep.subr.mxu0 0.0
        %417 = vmatpush1.msra.mxu0 0.0
        %418 = vmatprep.subr.mxu0 0.0
        %419 = vmatpush1.msra.mxu0 0.0
        %420 = vmatprep.subr.mxu0 0.0
        %421 = vmatpush1.msra.mxu0 0.0
        %422 = vmatprep.subr.mxu0 0.0
        %423 = vmatpush1.msra.mxu0 0.0
        %424 = vmatprep.subr.mxu0 0.0
        %425 = vmatpush1.msra.mxu0 0.0
        %426 = vmatprep.subr.mxu0 0.0
        %427 = vmatpush1.msra.mxu0 0.0
        %428 = vmatprep.subr.mxu0 0.0
        %429 = vmatpush1.msra.mxu0 0.0
        %430 = vmatprep.subr.mxu0 0.0
        %431 = vmatpush1.msra.mxu0 0.0
        %432 = vmatprep.subr.mxu0 0.0
        %433 = vmatpush1.msra.mxu0 0.0
        %434 = vmatprep.subr.mxu0 0.0
        %435 = vmatpush1.msra.mxu0 0.0
        %436 = vmatprep.subr.mxu0 0.0
        %437 = vmatpush1.msra.mxu0 0.0
        %438 = vmatprep.subr.mxu0 0.0
        %439 = vmatpush1.msra.mxu0 0.0
        %440 = vmatprep.subr.mxu0 0.0
        %441 = vmatpush1.msra.mxu0 0.0
        %442 = vmatprep.subr.mxu0 0.0
        %443 = vmatpush1.msra.mxu0 0.0
        %444 = vmatprep.subr.mxu0 0.0
        %445 = vmatpush1.msra.mxu0 0.0
        %446 = vmatprep.subr.mxu0 0.0
        %447 = vmatpush1.msra.mxu0 0.0
        %448 = vmatprep.mubr.f32.mxu0 0.0
        %v449 = vand.u32 %v204, 4294901760
        %450 = vmatmul.mubr.f32.gmra.mrb[0].mxu0 %v449
        %v451 = vpop.f32.mrb[0].mxu0
        %v452 = vadd.f32 %v301, %v451
        %v453 = vpop.f32.mrb[0].mxu0
        %454 = vmatprep.mubr.f32.mxu0 0.0
        %v455 = vand.u32 %v207, 4294901760
        %456 = vmatmul.mubr.f32.gmra.mrb[0].mxu0 %v455
        %v457 = vpop.f32.mrb[0].mxu0
        %v458 = vadd.f32 %v311, %v457
        %v459 = vpop.f32.mrb[0].mxu0
        %460 = vmatprep.mubr.f32.mxu0 0.0
        %v461 = vand.u32 %v210, 4294901760
        %462 = vmatmul.mubr.f32.gmra.mrb[0].mxu0 %v461
        %v463 = vpop.f32.mrb[0].mxu0
        %v464 = vadd.f32 %v321, %v463
        %v465 = vpop.f32.mrb[0].mxu0
        %466 = vmatprep.mubr.f32.mxu0 0.0
        %v467 = vand.u32 %v213, 4294901760
        %468 = vmatmul.mubr.f32.gmra.mrb[0].mxu0 %v467
        %v469 = vpop.f32.mrb[0].mxu0
        %v470 = vadd.f32 %v331, %v469
        %v471 = vpop.f32.mrb[0].mxu0
        %472 = vmatprep.mubr.f32.mxu0 0.0
        %v473 = vand.u32 %v216, 4294901760
        %474 = vmatmul.mubr.f32.gmra.mrb[0].mxu0 %v473
        %v475 = vpop.f32.mrb[0].mxu0
        %v476 = vadd.f32 %v341, %v475
        %v477 = vpop.f32.mrb[0].mxu0
        %478 = vmatprep.mubr.f32.mxu0 0.0
        %v479 = vand.u32 %v219, 4294901760
        %480 = vmatmul.mubr.f32.gmra.mrb[0].mxu0 %v479
        %v481 = vpop.f32.mrb[0].mxu0
        %v482 = vadd.f32 %v351, %v481
        %v483 = vpop.f32.mrb[0].mxu0
        %484 = vmatprep.mubr.f32.mxu0 0.0
        %v485 = vand.u32 %v222, 4294901760
        %486 = vmatmul.mubr.f32.gmra.mrb[0].mxu0 %v485
        %v487 = vpop.f32.mrb[0].mxu0
        %v488 = vadd.f32 %v361, %v487
        %v489 = vpop.f32.mrb[0].mxu0
        %490 = vmatprep.mubr.f32.mxu0 0.0
        %v491 = vand.u32 %v225, 4294901760
        %492 = vmatmul.mubr.f32.gmra.mrb[0].mxu0 %v491
        %v493 = vpop.f32.mrb[0].mxu0
        %v494 = vadd.f32 %v371, %v493
        %v495 = vpop.f32.mrb[0].mxu0
        %496 = vdwg.mxu0
        %497 = vmatprep.subr.mxu0 0.0
        %v498 = vand.u32 %v200, 4294901760
        %v499 = vsub.f32 %v200, %v498
        %500 = vmatpush1.msra.mxu0 %v499
        %501 = vmatprep.subr.mxu0 0.0
        %v502 = vand.u32 %v201, 4294901760
        %v503 = vsub.f32 %v201, %v502
        %504 = vmatpush1.msra.mxu0 %v503
        %505 = vmatprep.subr.mxu0 0.0
        %506 = vmatpush1.msra.mxu0 0.0
        %507 = vmatprep.subr.mxu0 0.0
        %508 = vmatpush1.msra.mxu0 0.0
        %509 = vmatprep.subr.mxu0 0.0
        %510 = vmatpush1.msra.mxu0 0.0
        %511 = vmatprep.subr.mxu0 0.0
        %512 = vmatpush1.msra.mxu0 0.0
        %513 = vmatprep.subr.mxu0 0.0
        %514 = vmatpush1.msra.mxu0 0.0
        %515 = vmatprep.subr.mxu0 0.0
        %516 = vmatpush1.msra.mxu0 0.0
        %517 = vmatprep.subr.mxu0 0.0
        %518 = vmatpush1.msra.mxu0 0.0
        %519 = vmatprep.subr.mxu0 0.0
        %520 = vmatpush1.msra.mxu0 0.0
        %521 = vmatprep.subr.mxu0 0.0
        %522 = vmatpush1.msra.mxu0 0.0
        %523 = vmatprep.subr.mxu0 0.0
        %524 = vmatpush1.msra.mxu0 0.0
        %525 = vmatprep.subr.mxu0 0.0
        %526 = vmatpush1.msra.mxu0 0.0
        %527 = vmatprep.subr.mxu0 0.0
        %528 = vmatpush1.msra.mxu0 0.0
        %529 = vmatprep.subr.mxu0 0.0
        %530 = vmatpush1.msra.mxu0 0.0
        %531 = vmatprep.subr.mxu0 0.0
        %532 = vmatpush1.msra.mxu0 0.0
        %533 = vmatprep.subr.mxu0 0.0
        %534 = vmatpush1.msra.mxu0 0.0
        %535 = vmatprep.subr.mxu0 0.0
        %536 = vmatpush1.msra.mxu0 0.0
        %537 = vmatprep.subr.mxu0 0.0
        %538 = vmatpush1.msra.mxu0 0.0
        %539 = vmatprep.subr.mxu0 0.0
        %540 = vmatpush1.msra.mxu0 0.0
        %541 = vmatprep.subr.mxu0 0.0
        %542 = vmatpush1.msra.mxu0 0.0
        %543 = vmatprep.subr.mxu0 0.0
        %544 = vmatpush1.msra.mxu0 0.0
        %545 = vmatprep.subr.mxu0 0.0
        %546 = vmatpush1.msra.mxu0 0.0
        %547 = vmatprep.subr.mxu0 0.0
        %548 = vmatpush1.msra.mxu0 0.0
        %549 = vmatprep.subr.mxu0 0.0
        %550 = vmatpush1.msra.mxu0 0.0
        %551 = vmatprep.subr.mxu0 0.0
        %552 = vmatpush1.msra.mxu0 0.0
        %553 = vmatprep.subr.mxu0 0.0
        %554 = vmatpush1.msra.mxu0 0.0
        %555 = vmatprep.subr.mxu0 0.0
        %556 = vmatpush1.msra.mxu0 0.0
        %557 = vmatprep.subr.mxu0 0.0
        %558 = vmatpush1.msra.mxu0 0.0
        %559 = vmatprep.subr.mxu0 0.0
        %560 = vmatpush1.msra.mxu0 0.0
        %561 = vmatprep.subr.mxu0 0.0
        %562 = vmatpush1.msra.mxu0 0.0
        %563 = vmatprep.subr.mxu0 0.0
        %564 = vmatpush1.msra.mxu0 0.0
        %565 = vmatprep.mubr.f32.mxu0 0.0
        %v566 = vand.u32 %v204, 4294901760
        %v567 = vsub.f32 %v204, %v566
        %568 = vmatmul.mubr.f32.gmra.mrb[0].mxu0 %v567
        %v569 = vpop.f32.mrb[0].mxu0
        %v570 = vadd.f32 %v452, %v569
        %v571 = vpop.f32.mrb[0].mxu0
        %572 = vmatprep.mubr.f32.mxu0 0.0
        %v573 = vand.u32 %v207, 4294901760
        %v574 = vsub.f32 %v207, %v573
        %575 = vmatmul.mubr.f32.gmra.mrb[0].mxu0 %v574
        %v576 = vpop.f32.mrb[0].mxu0
        %v577 = vadd.f32 %v458, %v576
        %v578 = vpop.f32.mrb[0].mxu0
        %579 = vmatprep.mubr.f32.mxu0 0.0
        %v580 = vand.u32 %v210, 4294901760
        %v581 = vsub.f32 %v210, %v580
        %582 = vmatmul.mubr.f32.gmra.mrb[0].mxu0 %v581
        %v583 = vpop.f32.mrb[0].mxu0
        %v584 = vadd.f32 %v464, %v583
        %v585 = vpop.f32.mrb[0].mxu0
        %586 = vmatprep.mubr.f32.mxu0 0.0
        %v587 = vand.u32 %v213, 4294901760
        %v588 = vsub.f32 %v213, %v587
        %589 = vmatmul.mubr.f32.gmra.mrb[0].mxu0 %v588
        %v590 = vpop.f32.mrb[0].mxu0
        %v591 = vadd.f32 %v470, %v590
        %v592 = vpop.f32.mrb[0].mxu0
        %593 = vmatprep.mubr.f32.mxu0 0.0
        %v594 = vand.u32 %v216, 4294901760
        %v595 = vsub.f32 %v216, %v594
        %596 = vmatmul.mubr.f32.gmra.mrb[0].mxu0 %v595
        %v597 = vpop.f32.mrb[0].mxu0
        %v598 = vadd.f32 %v476, %v597
        %v599 = vpop.f32.mrb[0].mxu0
        %600 = vmatprep.mubr.f32.mxu0 0.0
        %v601 = vand.u32 %v219, 4294901760
        %v602 = vsub.f32 %v219, %v601
        %603 = vmatmul.mubr.f32.gmra.mrb[0].mxu0 %v602
        %v604 = vpop.f32.mrb[0].mxu0
        %v605 = vadd.f32 %v482, %v604
        %v606 = vpop.f32.mrb[0].mxu0
        %607 = vmatprep.mubr.f32.mxu0 0.0
        %v608 = vand.u32 %v222, 4294901760
        %v609 = vsub.f32 %v222, %v608
        %610 = vmatmul.mubr.f32.gmra.mrb[0].mxu0 %v609
        %v611 = vpop.f32.mrb[0].mxu0
        %v612 = vadd.f32 %v488, %v611
        %v613 = vpop.f32.mrb[0].mxu0
        %614 = vmatprep.mubr.f32.mxu0 0.0
        %v615 = vand.u32 %v225, 4294901760
        %v616 = vsub.f32 %v225, %v615
        %617 = vmatmul.mubr.f32.gmra.mrb[0].mxu0 %v616
        %v618 = vpop.f32.mrb[0].mxu0
        %v619 = vadd.f32 %v494, %v618
        %v620 = vpop.f32.mrb[0].mxu0
        %621 = vdwg.mxu0
        %622 = vmatprep.subr.mxu0 0.0
        %v623 = vand.u32 %v200, 4294901760
        %624 = vmatpush1.msra.mxu0 %v623
        %625 = vmatprep.subr.mxu0 0.0
        %v626 = vand.u32 %v201, 4294901760
        %627 = vmatpush1.msra.mxu0 %v626
        %628 = vmatprep.subr.mxu0 0.0
        %629 = vmatpush1.msra.mxu0 0.0
        %630 = vmatprep.subr.mxu0 0.0
        %631 = vmatpush1.msra.mxu0 0.0
        %632 = vmatprep.subr.mxu0 0.0
        %633 = vmatpush1.msra.mxu0 0.0
        %634 = vmatprep.subr.mxu0 0.0
        %635 = vmatpush1.msra.mxu0 0.0
        %636 = vmatprep.subr.mxu0 0.0
        %637 = vmatpush1.msra.mxu0 0.0
        %638 = vmatprep.subr.mxu0 0.0
        %639 = vmatpush1.msra.mxu0 0.0
        %640 = vmatprep.subr.mxu0 0.0
        %641 = vmatpush1.msra.mxu0 0.0
        %642 = vmatprep.subr.mxu0 0.0
        %643 = vmatpush1.msra.mxu0 0.0
        %644 = vmatprep.subr.mxu0 0.0
        %645 = vmatpush1.msra.mxu0 0.0
        %646 = vmatprep.subr.mxu0 0.0
        %647 = vmatpush1.msra.mxu0 0.0
        %648 = vmatprep.subr.mxu0 0.0
        %649 = vmatpush1.msra.mxu0 0.0
        %650 = vmatprep.subr.mxu0 0.0
        %651 = vmatpush1.msra.mxu0 0.0
        %652 = vmatprep.subr.mxu0 0.0
        %653 = vmatpush1.msra.mxu0 0.0
        %654 = vmatprep.subr.mxu0 0.0
        %655 = vmatpush1.msra.mxu0 0.0
        %656 = vmatprep.subr.mxu0 0.0
        %657 = vmatpush1.msra.mxu0 0.0
        %658 = vmatprep.subr.mxu0 0.0
        %659 = vmatpush1.msra.mxu0 0.0
        %660 = vmatprep.subr.mxu0 0.0
        %661 = vmatpush1.msra.mxu0 0.0
        %662 = vmatprep.subr.mxu0 0.0
        %663 = vmatpush1.msra.mxu0 0.0
        %664 = vmatprep.subr.mxu0 0.0
        %665 = vmatpush1.msra.mxu0 0.0
        %666 = vmatprep.subr.mxu0 0.0
        %667 = vmatpush1.msra.mxu0 0.0
        %668 = vmatprep.subr.mxu0 0.0
        %669 = vmatpush1.msra.mxu0 0.0
        %670 = vmatprep.subr.mxu0 0.0
        %671 = vmatpush1.msra.mxu0 0.0
        %672 = vmatprep.subr.mxu0 0.0
        %673 = vmatpush1.msra.mxu0 0.0
        %674 = vmatprep.subr.mxu0 0.0
        %675 = vmatpush1.msra.mxu0 0.0
        %676 = vmatprep.subr.mxu0 0.0
        %677 = vmatpush1.msra.mxu0 0.0
        %678 = vmatprep.subr.mxu0 0.0
        %679 = vmatpush1.msra.mxu0 0.0
        %680 = vmatprep.subr.mxu0 0.0
        %681 = vmatpush1.msra.mxu0 0.0
        %682 = vmatprep.subr.mxu0 0.0
        %683 = vmatpush1.msra.mxu0 0.0
        %684 = vmatprep.subr.mxu0 0.0
        %685 = vmatpush1.msra.mxu0 0.0
        %686 = vmatprep.subr.mxu0 0.0
        %687 = vmatpush1.msra.mxu0 0.0
        %688 = vmatprep.mubr.f32.mxu0 0.0
        %v689 = vand.u32 %v204, 4294901760
        %v690 = vsub.f32 %v204, %v689
        %v691 = vand.u32 %v690, 4294901760
        %692 = vmatmul.mubr.f32.gmra.mrb[0].mxu0 %v691
        %v693 = vpop.f32.mrb[0].mxu0
        %v694 = vadd.f32 %v570, %v693
        %v695 = vpop.f32.mrb[0].mxu0
        %696 = vmatprep.mubr.f32.mxu0 0.0
        %v697 = vand.u32 %v207, 4294901760
        %v698 = vsub.f32 %v207, %v697
        %v699 = vand.u32 %v698, 4294901760
        %700 = vmatmul.mubr.f32.gmra.mrb[0].mxu0 %v699
        %v701 = vpop.f32.mrb[0].mxu0
        %v702 = vadd.f32 %v577, %v701
        %v703 = vpop.f32.mrb[0].mxu0
        %704 = vmatprep.mubr.f32.mxu0 0.0
        %v705 = vand.u32 %v210, 4294901760
        %v706 = vsub.f32 %v210, %v705
        %v707 = vand.u32 %v706, 4294901760
        %708 = vmatmul.mubr.f32.gmra.mrb[0].mxu0 %v707
        %v709 = vpop.f32.mrb[0].mxu0
        %v710 = vadd.f32 %v584, %v709
        %v711 = vpop.f32.mrb[0].mxu0
        %712 = vmatprep.mubr.f32.mxu0 0.0
        %v713 = vand.u32 %v213, 4294901760
        %v714 = vsub.f32 %v213, %v713
        %v715 = vand.u32 %v714, 4294901760
        %716 = vmatmul.mubr.f32.gmra.mrb[0].mxu0 %v715
        %v717 = vpop.f32.mrb[0].mxu0
        %v718 = vadd.f32 %v591, %v717
        %v719 = vpop.f32.mrb[0].mxu0
        %720 = vmatprep.mubr.f32.mxu0 0.0
        %v721 = vand.u32 %v216, 4294901760
        %v722 = vsub.f32 %v216, %v721
        %v723 = vand.u32 %v722, 4294901760
        %724 = vmatmul.mubr.f32.gmra.mrb[0].mxu0 %v723
        %v725 = vpop.f32.mrb[0].mxu0
        %v726 = vadd.f32 %v598, %v725
        %v727 = vpop.f32.mrb[0].mxu0
        %728 = vmatprep.mubr.f32.mxu0 0.0
        %v729 = vand.u32 %v219, 4294901760
        %v730 = vsub.f32 %v219, %v729
        %v731 = vand.u32 %v730, 4294901760
        %732 = vmatmul.mubr.f32.gmra.mrb[0].mxu0 %v731
        %v733 = vpop.f32.mrb[0].mxu0
        %v734 = vadd.f32 %v605, %v733
        %v735 = vpop.f32.mrb[0].mxu0
        %736 = vmatprep.mubr.f32.mxu0 0.0
        %v737 = vand.u32 %v222, 4294901760
        %v738 = vsub.f32 %v222, %v737
        %v739 = vand.u32 %v738, 4294901760
        %740 = vmatmul.mubr.f32.gmra.mrb[0].mxu0 %v739
        %v741 = vpop.f32.mrb[0].mxu0
        %v742 = vadd.f32 %v612, %v741
        %v743 = vpop.f32.mrb[0].mxu0
        %744 = vmatprep.mubr.f32.mxu0 0.0
        %v745 = vand.u32 %v225, 4294901760
        %v746 = vsub.f32 %v225, %v745
        %v747 = vand.u32 %v746, 4294901760
        %748 = vmatmul.mubr.f32.gmra.mrb[0].mxu0 %v747
        %v749 = vpop.f32.mrb[0].mxu0
        %v750 = vadd.f32 %v619, %v749
        %v751 = vpop.f32.mrb[0].mxu0
        %752 = vdwg.mxu0
        %753 = vmatprep.subr.mxu0 0.0
        %v754 = vand.u32 %v200, 4294901760
        %v755 = vsub.f32 %v200, %v754
        %v756 = vand.u32 %v755, 4294901760
        %757 = vmatpush1.msra.mxu0 %v756
        %758 = vmatprep.subr.mxu0 0.0
        %v759 = vand.u32 %v201, 4294901760
        %v760 = vsub.f32 %v201, %v759
        %v761 = vand.u32 %v760, 4294901760
        %762 = vmatpush1.msra.mxu0 %v761
        %763 = vmatprep.subr.mxu0 0.0
        %764 = vmatpush1.msra.mxu0 0.0
        %765 = vmatprep.subr.mxu0 0.0
        %766 = vmatpush1.msra.mxu0 0.0
        %767 = vmatprep.subr.mxu0 0.0
        %768 = vmatpush1.msra.mxu0 0.0
        %769 = vmatprep.subr.mxu0 0.0
        %770 = vmatpush1.msra.mxu0 0.0
        %771 = vmatprep.subr.mxu0 0.0
        %772 = vmatpush1.msra.mxu0 0.0
        %773 = vmatprep.subr.mxu0 0.0
        %774 = vmatpush1.msra.mxu0 0.0
        %775 = vmatprep.subr.mxu0 0.0
        %776 = vmatpush1.msra.mxu0 0.0
        %777 = vmatprep.subr.mxu0 0.0
        %778 = vmatpush1.msra.mxu0 0.0
        %779 = vmatprep.subr.mxu0 0.0
        %780 = vmatpush1.msra.mxu0 0.0
        %781 = vmatprep.subr.mxu0 0.0
        %782 = vmatpush1.msra.mxu0 0.0
        %783 = vmatprep.subr.mxu0 0.0
        %784 = vmatpush1.msra.mxu0 0.0
        %785 = vmatprep.subr.mxu0 0.0
        %786 = vmatpush1.msra.mxu0 0.0
        %787 = vmatprep.subr.mxu0 0.0
        %788 = vmatpush1.msra.mxu0 0.0
        %789 = vmatprep.subr.mxu0 0.0
        %790 = vmatpush1.msra.mxu0 0.0
        %791 = vmatprep.subr.mxu0 0.0
        %792 = vmatpush1.msra.mxu0 0.0
        %793 = vmatprep.subr.mxu0 0.0
        %794 = vmatpush1.msra.mxu0 0.0
        %795 = vmatprep.subr.mxu0 0.0
        %796 = vmatpush1.msra.mxu0 0.0
        %797 = vmatprep.subr.mxu0 0.0
        %798 = vmatpush1.msra.mxu0 0.0
        %799 = vmatprep.subr.mxu0 0.0
        %800 = vmatpush1.msra.mxu0 0.0
        %801 = vmatprep.subr.mxu0 0.0
        %802 = vmatpush1.msra.mxu0 0.0
        %803 = vmatprep.subr.mxu0 0.0
        %804 = vmatpush1.msra.mxu0 0.0
        %805 = vmatprep.subr.mxu0 0.0
        %806 = vmatpush1.msra.mxu0 0.0
        %807 = vmatprep.subr.mxu0 0.0
        %808 = vmatpush1.msra.mxu0 0.0
        %809 = vmatprep.subr.mxu0 0.0
        %810 = vmatpush1.msra.mxu0 0.0
        %811 = vmatprep.subr.mxu0 0.0
        %812 = vmatpush1.msra.mxu0 0.0
        %813 = vmatprep.subr.mxu0 0.0
        %814 = vmatpush1.msra.mxu0 0.0
        %815 = vmatprep.subr.mxu0 0.0
        %816 = vmatpush1.msra.mxu0 0.0
        %817 = vmatprep.subr.mxu0 0.0
        %818 = vmatpush1.msra.mxu0 0.0
        %819 = vmatprep.subr.mxu0 0.0
        %820 = vmatpush1.msra.mxu0 0.0
        %821 = vmatprep.subr.mxu0 0.0
        %822 = vmatpush1.msra.mxu0 0.0
        %823 = vmatprep.mubr.f32.mxu0 0.0
        %v824 = vand.u32 %v204, 4294901760
        %825 = vmatmul.mubr.f32.gmra.mrb[0].mxu0 %v824
        %v826 = vpop.f32.mrb[0].mxu0
        %v827 = vadd.f32 %v694, %v826
        %v828 = vpop.f32.mrb[0].mxu0
        %829 = vmatprep.mubr.f32.mxu0 0.0
        %v830 = vand.u32 %v207, 4294901760
        %831 = vmatmul.mubr.f32.gmra.mrb[0].mxu0 %v830
        %v832 = vpop.f32.mrb[0].mxu0
        %v833 = vadd.f32 %v702, %v832
        %v834 = vpop.f32.mrb[0].mxu0
        %835 = vmatprep.mubr.f32.mxu0 0.0
        %v836 = vand.u32 %v210, 4294901760
        %837 = vmatmul.mubr.f32.gmra.mrb[0].mxu0 %v836
        %v838 = vpop.f32.mrb[0].mxu0
        %v839 = vadd.f32 %v710, %v838
        %v840 = vpop.f32.mrb[0].mxu0
        %841 = vmatprep.mubr.f32.mxu0 0.0
        %v842 = vand.u32 %v213, 4294901760
        %843 = vmatmul.mubr.f32.gmra.mrb[0].mxu0 %v842
        %v844 = vpop.f32.mrb[0].mxu0
        %v845 = vadd.f32 %v718, %v844
        %v846 = vpop.f32.mrb[0].mxu0
        %847 = vmatprep.mubr.f32.mxu0 0.0
        %v848 = vand.u32 %v216, 4294901760
        %849 = vmatmul.mubr.f32.gmra.mrb[0].mxu0 %v848
        %v850 = vpop.f32.mrb[0].mxu0
        %v851 = vadd.f32 %v726, %v850
        %v852 = vpop.f32.mrb[0].mxu0
        %853 = vmatprep.mubr.f32.mxu0 0.0
        %v854 = vand.u32 %v219, 4294901760
        %855 = vmatmul.mubr.f32.gmra.mrb[0].mxu0 %v854
        %v856 = vpop.f32.mrb[0].mxu0
        %v857 = vadd.f32 %v734, %v856
        %v858 = vpop.f32.mrb[0].mxu0
        %859 = vmatprep.mubr.f32.mxu0 0.0
        %v860 = vand.u32 %v222, 4294901760
        %861 = vmatmul.mubr.f32.gmra.mrb[0].mxu0 %v860
        %v862 = vpop.f32.mrb[0].mxu0
        %v863 = vadd.f32 %v742, %v862
        %v864 = vpop.f32.mrb[0].mxu0
        %865 = vmatprep.mubr.f32.mxu0 0.0
        %v866 = vand.u32 %v225, 4294901760
        %867 = vmatmul.mubr.f32.gmra.mrb[0].mxu0 %v866
        %v868 = vpop.f32.mrb[0].mxu0
        %v869 = vadd.f32 %v750, %v868
        %v870 = vpop.f32.mrb[0].mxu0
        %871 = vdwg.mxu0
        %872 = vmatprep.subr.mxu0 0.0
        %v873 = vand.u32 %v200, 4294901760
        %874 = vmatpush1.msra.mxu0 %v873
        %875 = vmatprep.subr.mxu0 0.0
        %v876 = vand.u32 %v201, 4294901760
        %877 = vmatpush1.msra.mxu0 %v876
        %878 = vmatprep.subr.mxu0 0.0
        %879 = vmatpush1.msra.mxu0 0.0
        %880 = vmatprep.subr.mxu0 0.0
        %881 = vmatpush1.msra.mxu0 0.0
        %882 = vmatprep.subr.mxu0 0.0
        %883 = vmatpush1.msra.mxu0 0.0
        %884 = vmatprep.subr.mxu0 0.0
        %885 = vmatpush1.msra.mxu0 0.0
        %886 = vmatprep.subr.mxu0 0.0
        %887 = vmatpush1.msra.mxu0 0.0
        %888 = vmatprep.subr.mxu0 0.0
        %889 = vmatpush1.msra.mxu0 0.0
        %890 = vmatprep.subr.mxu0 0.0
        %891 = vmatpush1.msra.mxu0 0.0
        %892 = vmatprep.subr.mxu0 0.0
        %893 = vmatpush1.msra.mxu0 0.0
        %894 = vmatprep.subr.mxu0 0.0
        %895 = vmatpush1.msra.mxu0 0.0
        %896 = vmatprep.subr.mxu0 0.0
        %897 = vmatpush1.msra.mxu0 0.0
        %898 = vmatprep.subr.mxu0 0.0
        %899 = vmatpush1.msra.mxu0 0.0
        %900 = vmatprep.subr.mxu0 0.0
        %901 = vmatpush1.msra.mxu0 0.0
        %902 = vmatprep.subr.mxu0 0.0
        %903 = vmatpush1.msra.mxu0 0.0
        %904 = vmatprep.subr.mxu0 0.0
        %905 = vmatpush1.msra.mxu0 0.0
        %906 = vmatprep.subr.mxu0 0.0
        %907 = vmatpush1.msra.mxu0 0.0
        %908 = vmatprep.subr.mxu0 0.0
        %909 = vmatpush1.msra.mxu0 0.0
        %910 = vmatprep.subr.mxu0 0.0
        %911 = vmatpush1.msra.mxu0 0.0
        %912 = vmatprep.subr.mxu0 0.0
        %913 = vmatpush1.msra.mxu0 0.0
        %914 = vmatprep.subr.mxu0 0.0
        %915 = vmatpush1.msra.mxu0 0.0
        %916 = vmatprep.subr.mxu0 0.0
        %917 = vmatpush1.msra.mxu0 0.0
        %918 = vmatprep.subr.mxu0 0.0
        %919 = vmatpush1.msra.mxu0 0.0
        %920 = vmatprep.subr.mxu0 0.0
        %921 = vmatpush1.msra.mxu0 0.0
        %922 = vmatprep.subr.mxu0 0.0
        %923 = vmatpush1.msra.mxu0 0.0
        %924 = vmatprep.subr.mxu0 0.0
        %925 = vmatpush1.msra.mxu0 0.0
        %926 = vmatprep.subr.mxu0 0.0
        %927 = vmatpush1.msra.mxu0 0.0
        %928 = vmatprep.subr.mxu0 0.0
        %929 = vmatpush1.msra.mxu0 0.0
        %930 = vmatprep.subr.mxu0 0.0
        %931 = vmatpush1.msra.mxu0 0.0
        %932 = vmatprep.subr.mxu0 0.0
        %933 = vmatpush1.msra.mxu0 0.0
        %934 = vmatprep.subr.mxu0 0.0
        %935 = vmatpush1.msra.mxu0 0.0
        %936 = vmatprep.subr.mxu0 0.0
        %937 = vmatpush1.msra.mxu0 0.0
        %938 = vmatprep.mubr.f32.mxu0 0.0
        %v939 = vand.u32 %v204, 4294901760
        %940 = vmatmul.mubr.f32.gmra.mrb[0].mxu0 %v939
        %v941 = vpop.f32.mrb[0].mxu0
        %v942 = vadd.f32 %v827, %v941
        %v943 = vpop.f32.mrb[0].mxu0
        %944 = vmatprep.mubr.f32.mxu0 0.0
        %v945 = vand.u32 %v207, 4294901760
        %946 = vmatmul.mubr.f32.gmra.mrb[0].mxu0 %v945
        %v947 = vpop.f32.mrb[0].mxu0
        %v948 = vadd.f32 %v833, %v947
        %v949 = vpop.f32.mrb[0].mxu0
        %950 = vmatprep.mubr.f32.mxu0 0.0
        %v951 = vand.u32 %v210, 4294901760
        %952 = vmatmul.mubr.f32.gmra.mrb[0].mxu0 %v951
        %v953 = vpop.f32.mrb[0].mxu0
        %v954 = vadd.f32 %v839, %v953
        %v955 = vpop.f32.mrb[0].mxu0
        %956 = vmatprep.mubr.f32.mxu0 0.0
        %v957 = vand.u32 %v213, 4294901760
        %958 = vmatmul.mubr.f32.gmra.mrb[0].mxu0 %v957
        %v959 = vpop.f32.mrb[0].mxu0
        %v960 = vadd.f32 %v845, %v959
        %v961 = vpop.f32.mrb[0].mxu0
        %962 = vmatprep.mubr.f32.mxu0 0.0
        %v963 = vand.u32 %v216, 4294901760
        %964 = vmatmul.mubr.f32.gmra.mrb[0].mxu0 %v963
        %v965 = vpop.f32.mrb[0].mxu0
        %v966 = vadd.f32 %v851, %v965
        %v967 = vpop.f32.mrb[0].mxu0
        %968 = vmatprep.mubr.f32.mxu0 0.0
        %v969 = vand.u32 %v219, 4294901760
        %970 = vmatmul.mubr.f32.gmra.mrb[0].mxu0 %v969
        %v971 = vpop.f32.mrb[0].mxu0
        %v972 = vadd.f32 %v857, %v971
        %v973 = vpop.f32.mrb[0].mxu0
        %974 = vmatprep.mubr.f32.mxu0 0.0
        %v975 = vand.u32 %v222, 4294901760
        %976 = vmatmul.mubr.f32.gmra.mrb[0].mxu0 %v975
        %v977 = vpop.f32.mrb[0].mxu0
        %v978 = vadd.f32 %v863, %v977
        %v979 = vpop.f32.mrb[0].mxu0
        %980 = vmatprep.mubr.f32.mxu0 0.0
        %v981 = vand.u32 %v225, 4294901760
        %982 = vmatmul.mubr.f32.gmra.mrb[0].mxu0 %v981
        %v983 = vpop.f32.mrb[0].mxu0
        %v984 = vadd.f32 %v869, %v983
        %v985 = vpop.f32.mrb[0].mxu0
        %986 = vdwg.mxu0
        %987 = vxpose.xlu0.b32.start [1/16] %v942, 128
        %988 = vxpose.xlu0.b32.cont [2/16] %v948, 128
        %989 = vxpose.xlu0.b32.cont [3/16] 0.0, 128
        %990 = vxpose.xlu0.b32.cont [4/16] 0.0, 128
        %991 = vxpose.xlu0.b32.cont [5/16] 0.0, 128
        %992 = vxpose.xlu0.b32.cont [6/16] 0.0, 128
        %993 = vxpose.xlu0.b32.cont [7/16] 0.0, 128
        %994 = vxpose.xlu0.b32.cont [8/16] 0.0, 128
        %995 = vxpose.xlu0.b32.cont [9/16] 0.0, 128
        %996 = vxpose.xlu0.b32.cont [10/16] 0.0, 128
        %997 = vxpose.xlu0.b32.cont [11/16] 0.0, 128
        %998 = vxpose.xlu0.b32.cont [12/16] 0.0, 128
        %999 = vxpose.xlu0.b32.cont [13/16] 0.0, 128
        %1000 = vxpose.xlu0.b32.cont [14/16] 0.0, 128
        %1001 = vxpose.xlu0.b32.cont [15/16] 0.0, 128
        %1002 = vxpose.xlu0.b32.end [16/16] 0.0, 128
        %v1003 = vpop.trf.xlu0
        %v1004 = vpop.trf.xlu0
        %v1005 = vpop.trf.xlu0
        %v1006 = vpop.trf.xlu0
        %v1007 = vpop.trf.xlu0
        %v1008 = vpop.trf.xlu0
        %v1009 = vpop.trf.xlu0
        %v1010 = vpop.trf.xlu0
        %v1011 = vpop.trf.xlu0
        %v1012 = vpop.trf.xlu0
        %v1013 = vpop.trf.xlu0
        %v1014 = vpop.trf.xlu0
        %v1015 = vpop.trf.xlu0
        %v1016 = vpop.trf.xlu0
        %v1017 = vpop.trf.xlu0
        %v1018 = vpop.trf.xlu0
        %1019 = vxpose.xlu0.b32.start [1/16] %v954, 128
        %1020 = vxpose.xlu0.b32.cont [2/16] %v960, 128
        %1021 = vxpose.xlu0.b32.cont [3/16] 0.0, 128
        %1022 = vxpose.xlu0.b32.cont [4/16] 0.0, 128
        %1023 = vxpose.xlu0.b32.cont [5/16] 0.0, 128
        %1024 = vxpose.xlu0.b32.cont [6/16] 0.0, 128
        %1025 = vxpose.xlu0.b32.cont [7/16] 0.0, 128
        %1026 = vxpose.xlu0.b32.cont [8/16] 0.0, 128
        %1027 = vxpose.xlu0.b32.cont [9/16] 0.0, 128
        %1028 = vxpose.xlu0.b32.cont [10/16] 0.0, 128
        %1029 = vxpose.xlu0.b32.cont [11/16] 0.0, 128
        %1030 = vxpose.xlu0.b32.cont [12/16] 0.0, 128
        %1031 = vxpose.xlu0.b32.cont [13/16] 0.0, 128
        %1032 = vxpose.xlu0.b32.cont [14/16] 0.0, 128
        %1033 = vxpose.xlu0.b32.cont [15/16] 0.0, 128
        %1034 = vxpose.xlu0.b32.end [16/16] 0.0, 128
        %v1035 = vpop.trf.xlu0
        %v1036 = vpop.trf.xlu0
        %v1037 = vpop.trf.xlu0
        %v1038 = vpop.trf.xlu0
        %v1039 = vpop.trf.xlu0
        %v1040 = vpop.trf.xlu0
        %v1041 = vpop.trf.xlu0
        %v1042 = vpop.trf.xlu0
        %v1043 = vpop.trf.xlu0
        %v1044 = vpop.trf.xlu0
        %v1045 = vpop.trf.xlu0
        %v1046 = vpop.trf.xlu0
        %v1047 = vpop.trf.xlu0
        %v1048 = vpop.trf.xlu0
        %v1049 = vpop.trf.xlu0
        %v1050 = vpop.trf.xlu0
        %1051 = vxpose.xlu0.b32.start [1/16] %v966, 128
        %1052 = vxpose.xlu0.b32.cont [2/16] %v972, 128
        %1053 = vxpose.xlu0.b32.cont [3/16] 0.0, 128
        %1054 = vxpose.xlu0.b32.cont [4/16] 0.0, 128
        %1055 = vxpose.xlu0.b32.cont [5/16] 0.0, 128
        %1056 = vxpose.xlu0.b32.cont [6/16] 0.0, 128
        %1057 = vxpose.xlu0.b32.cont [7/16] 0.0, 128
        %1058 = vxpose.xlu0.b32.cont [8/16] 0.0, 128
        %1059 = vxpose.xlu0.b32.cont [9/16] 0.0, 128
        %1060 = vxpose.xlu0.b32.cont [10/16] 0.0, 128
        %1061 = vxpose.xlu0.b32.cont [11/16] 0.0, 128
        %1062 = vxpose.xlu0.b32.cont [12/16] 0.0, 128
        %1063 = vxpose.xlu0.b32.cont [13/16] 0.0, 128
        %1064 = vxpose.xlu0.b32.cont [14/16] 0.0, 128
        %1065 = vxpose.xlu0.b32.cont [15/16] 0.0, 128
        %1066 = vxpose.xlu0.b32.end [16/16] 0.0, 128
        %v1067 = vpop.trf.xlu0
        %v1068 = vpop.trf.xlu0
        %v1069 = vpop.trf.xlu0
        %v1070 = vpop.trf.xlu0
        %v1071 = vpop.trf.xlu0
        %v1072 = vpop.trf.xlu0
        %v1073 = vpop.trf.xlu0
        %v1074 = vpop.trf.xlu0
        %v1075 = vpop.trf.xlu0
        %v1076 = vpop.trf.xlu0
        %v1077 = vpop.trf.xlu0
        %v1078 = vpop.trf.xlu0
        %v1079 = vpop.trf.xlu0
        %v1080 = vpop.trf.xlu0
        %v1081 = vpop.trf.xlu0
        %v1082 = vpop.trf.xlu0
        %1083 = vxpose.xlu0.b32.start [1/16] %v978, 128
        %1084 = vxpose.xlu0.b32.cont [2/16] %v984, 128
        %1085 = vxpose.xlu0.b32.cont [3/16] 0.0, 128
        %1086 = vxpose.xlu0.b32.cont [4/16] 0.0, 128
        %1087 = vxpose.xlu0.b32.cont [5/16] 0.0, 128
        %1088 = vxpose.xlu0.b32.cont [6/16] 0.0, 128
        %1089 = vxpose.xlu0.b32.cont [7/16] 0.0, 128
        %1090 = vxpose.xlu0.b32.cont [8/16] 0.0, 128
        %1091 = vxpose.xlu0.b32.cont [9/16] 0.0, 128
        %1092 = vxpose.xlu0.b32.cont [10/16] 0.0, 128
        %1093 = vxpose.xlu0.b32.cont [11/16] 0.0, 128
        %1094 = vxpose.xlu0.b32.cont [12/16] 0.0, 128
        %1095 = vxpose.xlu0.b32.cont [13/16] 0.0, 128
        %1096 = vxpose.xlu0.b32.cont [14/16] 0.0, 128
        %1097 = vxpose.xlu0.b32.cont [15/16] 0.0, 128
        %1098 = vxpose.xlu0.b32.end [16/16] 0.0, 128
        %v1099 = vpop.trf.xlu0
        %v1100 = vpop.trf.xlu0
        %v1101 = vpop.trf.xlu0
        %v1102 = vpop.trf.xlu0
        %v1103 = vpop.trf.xlu0
        %v1104 = vpop.trf.xlu0
        %v1105 = vpop.trf.xlu0
        %v1106 = vpop.trf.xlu0
        %v1107 = vpop.trf.xlu0
        %v1108 = vpop.trf.xlu0
        %v1109 = vpop.trf.xlu0
        %v1110 = vpop.trf.xlu0
        %v1111 = vpop.trf.xlu0
        %v1112 = vpop.trf.xlu0
        %v1113 = vpop.trf.xlu0
        %v1114 = vpop.trf.xlu0
        %v1115 = vld [vmem:[%s1] sm:$0xff]
        %v1116 = vld [vmem:[%s1 + $0x8] sm:$0xff]
        %v1118 = vsel %vm202, %v1003, 0
        %v1121 = vsel %vm202, %v1035, 0
        %v1124 = vsel %vm202, %v1067, 0
        %v1127 = vsel %vm202, %v1099, 0
        %1129 = vmatprep.subr.mxu0 0.0
        %v1130 = vand.u32 %v1115, 4294901760
        %1131 = vmatpush1.msra.mxu0 %v1130
        %1132 = vmatprep.subr.mxu0 0.0
        %v1133 = vand.u32 %v1116, 4294901760
        %1134 = vmatpush1.msra.mxu0 %v1133
        %1135 = vmatprep.subr.mxu0 0.0
        %1136 = vmatpush1.msra.mxu0 0.0
        %1137 = vmatprep.subr.mxu0 0.0
        %1138 = vmatpush1.msra.mxu0 0.0
        %1139 = vmatprep.subr.mxu0 0.0
        %1140 = vmatpush1.msra.mxu0 0.0
        %1141 = vmatprep.subr.mxu0 0.0
        %1142 = vmatpush1.msra.mxu0 0.0
        %1143 = vmatprep.subr.mxu0 0.0
        %1144 = vmatpush1.msra.mxu0 0.0
        %1145 = vmatprep.subr.mxu0 0.0
        %1146 = vmatpush1.msra.mxu0 0.0
        %1147 = vmatprep.subr.mxu0 0.0
        %1148 = vmatpush1.msra.mxu0 0.0
        %1149 = vmatprep.subr.mxu0 0.0
        %1150 = vmatpush1.msra.mxu0 0.0
        %1151 = vmatprep.subr.mxu0 0.0
        %1152 = vmatpush1.msra.mxu0 0.0
        %1153 = vmatprep.subr.mxu0 0.0
        %1154 = vmatpush1.msra.mxu0 0.0
        %1155 = vmatprep.subr.mxu0 0.0
        %1156 = vmatpush1.msra.mxu0 0.0
        %1157 = vmatprep.subr.mxu0 0.0
        %1158 = vmatpush1.msra.mxu0 0.0
        %1159 = vmatprep.subr.mxu0 0.0
        %1160 = vmatpush1.msra.mxu0 0.0
        %1161 = vmatprep.subr.mxu0 0.0
        %1162 = vmatpush1.msra.mxu0 0.0
        %1163 = vmatprep.subr.mxu0 0.0
        %1164 = vmatpush1.msra.mxu0 0.0
        %1165 = vmatprep.subr.mxu0 0.0
        %1166 = vmatpush1.msra.mxu0 0.0
        %1167 = vmatprep.subr.mxu0 0.0
        %1168 = vmatpush1.msra.mxu0 0.0
        %1169 = vmatprep.subr.mxu0 0.0
        %1170 = vmatpush1.msra.mxu0 0.0
        %1171 = vmatprep.subr.mxu0 0.0
        %1172 = vmatpush1.msra.mxu0 0.0
        %1173 = vmatprep.subr.mxu0 0.0
        %1174 = vmatpush1.msra.mxu0 0.0
        %1175 = vmatprep.subr.mxu0 0.0
        %1176 = vmatpush1.msra.mxu0 0.0
        %1177 = vmatprep.subr.mxu0 0.0
        %1178 = vmatpush1.msra.mxu0 0.0
        %1179 = vmatprep.subr.mxu0 0.0
        %1180 = vmatpush1.msra.mxu0 0.0
        %1181 = vmatprep.subr.mxu0 0.0
        %1182 = vmatpush1.msra.mxu0 0.0
        %1183 = vmatprep.subr.mxu0 0.0
        %1184 = vmatpush1.msra.mxu0 0.0
        %1185 = vmatprep.subr.mxu0 0.0
        %1186 = vmatpush1.msra.mxu0 0.0
        %1187 = vmatprep.subr.mxu0 0.0
        %1188 = vmatpush1.msra.mxu0 0.0
        %1189 = vmatprep.subr.mxu0 0.0
        %1190 = vmatpush1.msra.mxu0 0.0
        %1191 = vmatprep.subr.mxu0 0.0
        %1192 = vmatpush1.msra.mxu0 0.0
        %1193 = vmatprep.subr.mxu0 0.0
        %1194 = vmatpush1.msra.mxu0 0.0
        %1195 = vmatprep.mubr.f32.mxu0 0.0
        %v1196 = vand.u32 %v1118, 4294901760
        %v1197 = vsub.f32 %v1118, %v1196
        %v1198 = vand.u32 %v1197, 4294901760
        %v1199 = vsub.f32 %v1197, %v1198
        %v1200 = vand.u32 %v1199, 4294901760
        %1201 = vmatmul.mubr.f32.gmra.mrb[0].mxu0 %v1200
        %v1202 = vpop.f32.mrb[0].mxu0
        %v1203 = vadd.f32 0.0, %v1202
        %v1204 = vpop.f32.mrb[0].mxu0
        %1205 = vmatprep.mubr.f32.mxu0 0.0
        %v1206 = vand.u32 %v1121, 4294901760
        %v1207 = vsub.f32 %v1121, %v1206
        %v1208 = vand.u32 %v1207, 4294901760
        %v1209 = vsub.f32 %v1207, %v1208
        %v1210 = vand.u32 %v1209, 4294901760
        %1211 = vmatmul.mubr.f32.gmra.mrb[0].mxu0 %v1210
        %v1212 = vpop.f32.mrb[0].mxu0
        %v1213 = vadd.f32 0.0, %v1212
        %v1214 = vpop.f32.mrb[0].mxu0
        %1215 = vmatprep.mubr.f32.mxu0 0.0
        %v1216 = vand.u32 %v1124, 4294901760
        %v1217 = vsub.f32 %v1124, %v1216
        %v1218 = vand.u32 %v1217, 4294901760
        %v1219 = vsub.f32 %v1217, %v1218
        %v1220 = vand.u32 %v1219, 4294901760
        %1221 = vmatmul.mubr.f32.gmra.mrb[0].mxu0 %v1220
        %v1222 = vpop.f32.mrb[0].mxu0
        %v1223 = vadd.f32 0.0, %v1222
        %v1224 = vpop.f32.mrb[0].mxu0
        %1225 = vmatprep.mubr.f32.mxu0 0.0
        %v1226 = vand.u32 %v1127, 4294901760
        %v1227 = vsub.f32 %v1127, %v1226
        %v1228 = vand.u32 %v1227, 4294901760
        %v1229 = vsub.f32 %v1227, %v1228
        %v1230 = vand.u32 %v1229, 4294901760
        %1231 = vmatmul.mubr.f32.gmra.mrb[0].mxu0 %v1230
        %v1232 = vpop.f32.mrb[0].mxu0
        %v1233 = vadd.f32 0.0, %v1232
        %v1234 = vpop.f32.mrb[0].mxu0
        %1235 = vdwg.mxu0
        %1236 = vmatprep.subr.mxu0 0.0
        %v1237 = vand.u32 %v1115, 4294901760
        %v1238 = vsub.f32 %v1115, %v1237
        %v1239 = vand.u32 %v1238, 4294901760
        %v1240 = vsub.f32 %v1238, %v1239
        %v1241 = vand.u32 %v1240, 4294901760
        %1242 = vmatpush1.msra.mxu0 %v1241
        %1243 = vmatprep.subr.mxu0 0.0
        %v1244 = vand.u32 %v1116, 4294901760
        %v1245 = vsub.f32 %v1116, %v1244
        %v1246 = vand.u32 %v1245, 4294901760
        %v1247 = vsub.f32 %v1245, %v1246
        %v1248 = vand.u32 %v1247, 4294901760
        %1249 = vmatpush1.msra.mxu0 %v1248
        %1250 = vmatprep.subr.mxu0 0.0
        %1251 = vmatpush1.msra.mxu0 0.0
        %1252 = vmatprep.subr.mxu0 0.0
        %1253 = vmatpush1.msra.mxu0 0.0
        %1254 = vmatprep.subr.mxu0 0.0
        %1255 = vmatpush1.msra.mxu0 0.0
        %1256 = vmatprep.subr.mxu0 0.0
        %1257 = vmatpush1.msra.mxu0 0.0
        %1258 = vmatprep.subr.mxu0 0.0
        %1259 = vmatpush1.msra.mxu0 0.0
        %1260 = vmatprep.subr.mxu0 0.0
        %1261 = vmatpush1.msra.mxu0 0.0
        %1262 = vmatprep.subr.mxu0 0.0
        %1263 = vmatpush1.msra.mxu0 0.0
        %1264 = vmatprep.subr.mxu0 0.0
        %1265 = vmatpush1.msra.mxu0 0.0
        %1266 = vmatprep.subr.mxu0 0.0
        %1267 = vmatpush1.msra.mxu0 0.0
        %1268 = vmatprep.subr.mxu0 0.0
        %1269 = vmatpush1.msra.mxu0 0.0
        %1270 = vmatprep.subr.mxu0 0.0
        %1271 = vmatpush1.msra.mxu0 0.0
        %1272 = vmatprep.subr.mxu0 0.0
        %1273 = vmatpush1.msra.mxu0 0.0
        %1274 = vmatprep.subr.mxu0 0.0
        %1275 = vmatpush1.msra.mxu0 0.0
        %1276 = vmatprep.subr.mxu0 0.0
        %1277 = vmatpush1.msra.mxu0 0.0
        %1278 = vmatprep.subr.mxu0 0.0
        %1279 = vmatpush1.msra.mxu0 0.0
        %1280 = vmatprep.subr.mxu0 0.0
        %1281 = vmatpush1.msra.mxu0 0.0
        %1282 = vmatprep.subr.mxu0 0.0
        %1283 = vmatpush1.msra.mxu0 0.0
        %1284 = vmatprep.subr.mxu0 0.0
        %1285 = vmatpush1.msra.mxu0 0.0
        %1286 = vmatprep.subr.mxu0 0.0
        %1287 = vmatpush1.msra.mxu0 0.0
        %1288 = vmatprep.subr.mxu0 0.0
        %1289 = vmatpush1.msra.mxu0 0.0
        %1290 = vmatprep.subr.mxu0 0.0
        %1291 = vmatpush1.msra.mxu0 0.0
        %1292 = vmatprep.subr.mxu0 0.0
        %1293 = vmatpush1.msra.mxu0 0.0
        %1294 = vmatprep.subr.mxu0 0.0
        %1295 = vmatpush1.msra.mxu0 0.0
        %1296 = vmatprep.subr.mxu0 0.0
        %1297 = vmatpush1.msra.mxu0 0.0
        %1298 = vmatprep.subr.mxu0 0.0
        %1299 = vmatpush1.msra.mxu0 0.0
        %1300 = vmatprep.subr.mxu0 0.0
        %1301 = vmatpush1.msra.mxu0 0.0
        %1302 = vmatprep.subr.mxu0 0.0
        %1303 = vmatpush1.msra.mxu0 0.0
        %1304 = vmatprep.subr.mxu0 0.0
        %1305 = vmatpush1.msra.mxu0 0.0
        %1306 = vmatprep.subr.mxu0 0.0
        %1307 = vmatpush1.msra.mxu0 0.0
        %1308 = vmatprep.subr.mxu0 0.0
        %1309 = vmatpush1.msra.mxu0 0.0
        %1310 = vmatprep.mubr.f32.mxu0 0.0
        %v1311 = vand.u32 %v1118, 4294901760
        %1312 = vmatmul.mubr.f32.gmra.mrb[0].mxu0 %v1311
        %v1313 = vpop.f32.mrb[0].mxu0
        %v1314 = vadd.f32 %v1203, %v1313
        %v1315 = vpop.f32.mrb[0].mxu0
        %1316 = vmatprep.mubr.f32.mxu0 0.0
        %v1317 = vand.u32 %v1121, 4294901760
        %1318 = vmatmul.mubr.f32.gmra.mrb[0].mxu0 %v1317
        %v1319 = vpop.f32.mrb[0].mxu0
        %v1320 = vadd.f32 %v1213, %v1319
        %v1321 = vpop.f32.mrb[0].mxu0
        %1322 = vmatprep.mubr.f32.mxu0 0.0
        %v1323 = vand.u32 %v1124, 4294901760
        %1324 = vmatmul.mubr.f32.gmra.mrb[0].mxu0 %v1323
        %v1325 = vpop.f32.mrb[0].mxu0
        %v1326 = vadd.f32 %v1223, %v1325
        %v1327 = vpop.f32.mrb[0].mxu0
        %1328 = vmatprep.mubr.f32.mxu0 0.0
        %v1329 = vand.u32 %v1127, 4294901760
        %1330 = vmatmul.mubr.f32.gmra.mrb[0].mxu0 %v1329
        %v1331 = vpop.f32.mrb[0].mxu0
        %v1332 = vadd.f32 %v1233, %v1331
        %v1333 = vpop.f32.mrb[0].mxu0
        %1334 = vdwg.mxu0
        %1335 = vmatprep.subr.mxu0 0.0
        %v1336 = vand.u32 %v1115, 4294901760
        %v1337 = vsub.f32 %v1115, %v1336
        %1338 = vmatpush1.msra.mxu0 %v1337
        %1339 = vmatprep.subr.mxu0 0.0
        %v1340 = vand.u32 %v1116, 4294901760
        %v1341 = vsub.f32 %v1116, %v1340
        %1342 = vmatpush1.msra.mxu0 %v1341
        %1343 = vmatprep.subr.mxu0 0.0
        %1344 = vmatpush1.msra.mxu0 0.0
        %1345 = vmatprep.subr.mxu0 0.0
        %1346 = vmatpush1.msra.mxu0 0.0
        %1347 = vmatprep.subr.mxu0 0.0
        %1348 = vmatpush1.msra.mxu0 0.0
        %1349 = vmatprep.subr.mxu0 0.0
        %1350 = vmatpush1.msra.mxu0 0.0
        %1351 = vmatprep.subr.mxu0 0.0
        %1352 = vmatpush1.msra.mxu0 0.0
        %1353 = vmatprep.subr.mxu0 0.0
        %1354 = vmatpush1.msra.mxu0 0.0
        %1355 = vmatprep.subr.mxu0 0.0
        %1356 = vmatpush1.msra.mxu0 0.0
        %1357 = vmatprep.subr.mxu0 0.0
        %1358 = vmatpush1.msra.mxu0 0.0
        %1359 = vmatprep.subr.mxu0 0.0
        %1360 = vmatpush1.msra.mxu0 0.0
        %1361 = vmatprep.subr.mxu0 0.0
        %1362 = vmatpush1.msra.mxu0 0.0
        %1363 = vmatprep.subr.mxu0 0.0
        %1364 = vmatpush1.msra.mxu0 0.0
        %1365 = vmatprep.subr.mxu0 0.0
        %1366 = vmatpush1.msra.mxu0 0.0
        %1367 = vmatprep.subr.mxu0 0.0
        %1368 = vmatpush1.msra.mxu0 0.0
        %1369 = vmatprep.subr.mxu0 0.0
        %1370 = vmatpush1.msra.mxu0 0.0
        %1371 = vmatprep.subr.mxu0 0.0
        %1372 = vmatpush1.msra.mxu0 0.0
        %1373 = vmatprep.subr.mxu0 0.0
        %1374 = vmatpush1.msra.mxu0 0.0
        %1375 = vmatprep.subr.mxu0 0.0
        %1376 = vmatpush1.msra.mxu0 0.0
        %1377 = vmatprep.subr.mxu0 0.0
        %1378 = vmatpush1.msra.mxu0 0.0
        %1379 = vmatprep.subr.mxu0 0.0
        %1380 = vmatpush1.msra.mxu0 0.0
        %1381 = vmatprep.subr.mxu0 0.0
        %1382 = vmatpush1.msra.mxu0 0.0
        %1383 = vmatprep.subr.mxu0 0.0
        %1384 = vmatpush1.msra.mxu0 0.0
        %1385 = vmatprep.subr.mxu0 0.0
        %1386 = vmatpush1.msra.mxu0 0.0
        %1387 = vmatprep.subr.mxu0 0.0
        %1388 = vmatpush1.msra.mxu0 0.0
        %1389 = vmatprep.subr.mxu0 0.0
        %1390 = vmatpush1.msra.mxu0 0.0
        %1391 = vmatprep.subr.mxu0 0.0
        %1392 = vmatpush1.msra.mxu0 0.0
        %1393 = vmatprep.subr.mxu0 0.0
        %1394 = vmatpush1.msra.mxu0 0.0
        %1395 = vmatprep.subr.mxu0 0.0
        %1396 = vmatpush1.msra.mxu0 0.0
        %1397 = vmatprep.subr.mxu0 0.0
        %1398 = vmatpush1.msra.mxu0 0.0
        %1399 = vmatprep.subr.mxu0 0.0
        %1400 = vmatpush1.msra.mxu0 0.0
        %1401 = vmatprep.subr.mxu0 0.0
        %1402 = vmatpush1.msra.mxu0 0.0
        %1403 = vmatprep.mubr.f32.mxu0 0.0
        %v1404 = vand.u32 %v1118, 4294901760
        %v1405 = vsub.f32 %v1118, %v1404
        %1406 = vmatmul.mubr.f32.gmra.mrb[0].mxu0 %v1405
        %v1407 = vpop.f32.mrb[0].mxu0
        %v1408 = vadd.f32 %v1314, %v1407
        %v1409 = vpop.f32.mrb[0].mxu0
        %1410 = vmatprep.mubr.f32.mxu0 0.0
        %v1411 = vand.u32 %v1121, 4294901760
        %v1412 = vsub.f32 %v1121, %v1411
        %1413 = vmatmul.mubr.f32.gmra.mrb[0].mxu0 %v1412
        %v1414 = vpop.f32.mrb[0].mxu0
        %v1415 = vadd.f32 %v1320, %v1414
        %v1416 = vpop.f32.mrb[0].mxu0
        %1417 = vmatprep.mubr.f32.mxu0 0.0
        %v1418 = vand.u32 %v1124, 4294901760
        %v1419 = vsub.f32 %v1124, %v1418
        %1420 = vmatmul.mubr.f32.gmra.mrb[0].mxu0 %v1419
        %v1421 = vpop.f32.mrb[0].mxu0
        %v1422 = vadd.f32 %v1326, %v1421
        %v1423 = vpop.f32.mrb[0].mxu0
        %1424 = vmatprep.mubr.f32.mxu0 0.0
        %v1425 = vand.u32 %v1127, 4294901760
        %v1426 = vsub.f32 %v1127, %v1425
        %1427 = vmatmul.mubr.f32.gmra.mrb[0].mxu0 %v1426
        %v1428 = vpop.f32.mrb[0].mxu0
        %v1429 = vadd.f32 %v1332, %v1428
        %v1430 = vpop.f32.mrb[0].mxu0
        %1431 = vdwg.mxu0
        %1432 = vmatprep.subr.mxu0 0.0
        %v1433 = vand.u32 %v1115, 4294901760
        %1434 = vmatpush1.msra.mxu0 %v1433
        %1435 = vmatprep.subr.mxu0 0.0
        %v1436 = vand.u32 %v1116, 4294901760
        %1437 = vmatpush1.msra.mxu0 %v1436
        %1438 = vmatprep.subr.mxu0 0.0
        %1439 = vmatpush1.msra.mxu0 0.0
        %1440 = vmatprep.subr.mxu0 0.0
        %1441 = vmatpush1.msra.mxu0 0.0
        %1442 = vmatprep.subr.mxu0 0.0
        %1443 = vmatpush1.msra.mxu0 0.0
        %1444 = vmatprep.subr.mxu0 0.0
        %1445 = vmatpush1.msra.mxu0 0.0
        %1446 = vmatprep.subr.mxu0 0.0
        %1447 = vmatpush1.msra.mxu0 0.0
        %1448 = vmatprep.subr.mxu0 0.0
        %1449 = vmatpush1.msra.mxu0 0.0
        %1450 = vmatprep.subr.mxu0 0.0
        %1451 = vmatpush1.msra.mxu0 0.0
        %1452 = vmatprep.subr.mxu0 0.0
        %1453 = vmatpush1.msra.mxu0 0.0
        %1454 = vmatprep.subr.mxu0 0.0
        %1455 = vmatpush1.msra.mxu0 0.0
        %1456 = vmatprep.subr.mxu0 0.0
        %1457 = vmatpush1.msra.mxu0 0.0
        %1458 = vmatprep.subr.mxu0 0.0
        %1459 = vmatpush1.msra.mxu0 0.0
        %1460 = vmatprep.subr.mxu0 0.0
        %1461 = vmatpush1.msra.mxu0 0.0
        %1462 = vmatprep.subr.mxu0 0.0
        %1463 = vmatpush1.msra.mxu0 0.0
        %1464 = vmatprep.subr.mxu0 0.0
        %1465 = vmatpush1.msra.mxu0 0.0
        %1466 = vmatprep.subr.mxu0 0.0
        %1467 = vmatpush1.msra.mxu0 0.0
        %1468 = vmatprep.subr.mxu0 0.0
        %1469 = vmatpush1.msra.mxu0 0.0
        %1470 = vmatprep.subr.mxu0 0.0
        %1471 = vmatpush1.msra.mxu0 0.0
        %1472 = vmatprep.subr.mxu0 0.0
        %1473 = vmatpush1.msra.mxu0 0.0
        %1474 = vmatprep.subr.mxu0 0.0
        %1475 = vmatpush1.msra.mxu0 0.0
        %1476 = vmatprep.subr.mxu0 0.0
        %1477 = vmatpush1.msra.mxu0 0.0
        %1478 = vmatprep.subr.mxu0 0.0
        %1479 = vmatpush1.msra.mxu0 0.0
        %1480 = vmatprep.subr.mxu0 0.0
        %1481 = vmatpush1.msra.mxu0 0.0
        %1482 = vmatprep.subr.mxu0 0.0
        %1483 = vmatpush1.msra.mxu0 0.0
        %1484 = vmatprep.subr.mxu0 0.0
        %1485 = vmatpush1.msra.mxu0 0.0
        %1486 = vmatprep.subr.mxu0 0.0
        %1487 = vmatpush1.msra.mxu0 0.0
        %1488 = vmatprep.subr.mxu0 0.0
        %1489 = vmatpush1.msra.mxu0 0.0
        %1490 = vmatprep.subr.mxu0 0.0
        %1491 = vmatpush1.msra.mxu0 0.0
        %1492 = vmatprep.subr.mxu0 0.0
        %1493 = vmatpush1.msra.mxu0 0.0
        %1494 = vmatprep.subr.mxu0 0.0
        %1495 = vmatpush1.msra.mxu0 0.0
        %1496 = vmatprep.subr.mxu0 0.0
        %1497 = vmatpush1.msra.mxu0 0.0
        %1498 = vmatprep.mubr.f32.mxu0 0.0
        %v1499 = vand.u32 %v1118, 4294901760
        %v1500 = vsub.f32 %v1118, %v1499
        %v1501 = vand.u32 %v1500, 4294901760
        %1502 = vmatmul.mubr.f32.gmra.mrb[0].mxu0 %v1501
        %v1503 = vpop.f32.mrb[0].mxu0
        %v1504 = vadd.f32 %v1408, %v1503
        %v1505 = vpop.f32.mrb[0].mxu0
        %1506 = vmatprep.mubr.f32.mxu0 0.0
        %v1507 = vand.u32 %v1121, 4294901760
        %v1508 = vsub.f32 %v1121, %v1507
        %v1509 = vand.u32 %v1508, 4294901760
        %1510 = vmatmul.mubr.f32.gmra.mrb[0].mxu0 %v1509
        %v1511 = vpop.f32.mrb[0].mxu0
        %v1512 = vadd.f32 %v1415, %v1511
        %v1513 = vpop.f32.mrb[0].mxu0
        %1514 = vmatprep.mubr.f32.mxu0 0.0
        %v1515 = vand.u32 %v1124, 4294901760
        %v1516 = vsub.f32 %v1124, %v1515
        %v1517 = vand.u32 %v1516, 4294901760
        %1518 = vmatmul.mubr.f32.gmra.mrb[0].mxu0 %v1517
        %v1519 = vpop.f32.mrb[0].mxu0
        %v1520 = vadd.f32 %v1422, %v1519
        %v1521 = vpop.f32.mrb[0].mxu0
        %1522 = vmatprep.mubr.f32.mxu0 0.0
        %v1523 = vand.u32 %v1127, 4294901760
        %v1524 = vsub.f32 %v1127, %v1523
        %v1525 = vand.u32 %v1524, 4294901760
        %1526 = vmatmul.mubr.f32.gmra.mrb[0].mxu0 %v1525
        %v1527 = vpop.f32.mrb[0].mxu0
        %v1528 = vadd.f32 %v1429, %v1527
        %v1529 = vpop.f32.mrb[0].mxu0
        %1530 = vdwg.mxu0
        %1531 = vmatprep.subr.mxu0 0.0
        %v1532 = vand.u32 %v1115, 4294901760
        %v1533 = vsub.f32 %v1115, %v1532
        %v1534 = vand.u32 %v1533, 4294901760
        %1535 = vmatpush1.msra.mxu0 %v1534
        %1536 = vmatprep.subr.mxu0 0.0
        %v1537 = vand.u32 %v1116, 4294901760
        %v1538 = vsub.f32 %v1116, %v1537
        %v1539 = vand.u32 %v1538, 4294901760
        %1540 = vmatpush1.msra.mxu0 %v1539
        %1541 = vmatprep.subr.mxu0 0.0
        %1542 = vmatpush1.msra.mxu0 0.0
        %1543 = vmatprep.subr.mxu0 0.0
        %1544 = vmatpush1.msra.mxu0 0.0
        %1545 = vmatprep.subr.mxu0 0.0
        %1546 = vmatpush1.msra.mxu0 0.0
        %1547 = vmatprep.subr.mxu0 0.0
        %1548 = vmatpush1.msra.mxu0 0.0
        %1549 = vmatprep.subr.mxu0 0.0
        %1550 = vmatpush1.msra.mxu0 0.0
        %1551 = vmatprep.subr.mxu0 0.0
        %1552 = vmatpush1.msra.mxu0 0.0
        %1553 = vmatprep.subr.mxu0 0.0
        %1554 = vmatpush1.msra.mxu0 0.0
        %1555 = vmatprep.subr.mxu0 0.0
        %1556 = vmatpush1.msra.mxu0 0.0
        %1557 = vmatprep.subr.mxu0 0.0
        %1558 = vmatpush1.msra.mxu0 0.0
        %1559 = vmatprep.subr.mxu0 0.0
        %1560 = vmatpush1.msra.mxu0 0.0
        %1561 = vmatprep.subr.mxu0 0.0
        %1562 = vmatpush1.msra.mxu0 0.0
        %1563 = vmatprep.subr.mxu0 0.0
        %1564 = vmatpush1.msra.mxu0 0.0
        %1565 = vmatprep.subr.mxu0 0.0
        %1566 = vmatpush1.msra.mxu0 0.0
        %1567 = vmatprep.subr.mxu0 0.0
        %1568 = vmatpush1.msra.mxu0 0.0
        %1569 = vmatprep.subr.mxu0 0.0
        %1570 = vmatpush1.msra.mxu0 0.0
        %1571 = vmatprep.subr.mxu0 0.0
        %1572 = vmatpush1.msra.mxu0 0.0
        %1573 = vmatprep.subr.mxu0 0.0
        %1574 = vmatpush1.msra.mxu0 0.0
        %1575 = vmatprep.subr.mxu0 0.0
        %1576 = vmatpush1.msra.mxu0 0.0
        %1577 = vmatprep.subr.mxu0 0.0
        %1578 = vmatpush1.msra.mxu0 0.0
        %1579 = vmatprep.subr.mxu0 0.0
        %1580 = vmatpush1.msra.mxu0 0.0
        %1581 = vmatprep.subr.mxu0 0.0
        %1582 = vmatpush1.msra.mxu0 0.0
        %1583 = vmatprep.subr.mxu0 0.0
        %1584 = vmatpush1.msra.mxu0 0.0
        %1585 = vmatprep.subr.mxu0 0.0
        %1586 = vmatpush1.msra.mxu0 0.0
        %1587 = vmatprep.subr.mxu0 0.0
        %1588 = vmatpush1.msra.mxu0 0.0
        %1589 = vmatprep.subr.mxu0 0.0
        %1590 = vmatpush1.msra.mxu0 0.0
        %1591 = vmatprep.subr.mxu0 0.0
        %1592 = vmatpush1.msra.mxu0 0.0
        %1593 = vmatprep.subr.mxu0 0.0
        %1594 = vmatpush1.msra.mxu0 0.0
        %1595 = vmatprep.subr.mxu0 0.0
        %1596 = vmatpush1.msra.mxu0 0.0
        %1597 = vmatprep.subr.mxu0 0.0
        %1598 = vmatpush1.msra.mxu0 0.0
        %1599 = vmatprep.subr.mxu0 0.0
        %1600 = vmatpush1.msra.mxu0 0.0
        %1601 = vmatprep.mubr.f32.mxu0 0.0
        %v1602 = vand.u32 %v1118, 4294901760
        %1603 = vmatmul.mubr.f32.gmra.mrb[0].mxu0 %v1602
        %v1604 = vpop.f32.mrb[0].mxu0
        %v1605 = vadd.f32 %v1504, %v1604
        %v1606 = vpop.f32.mrb[0].mxu0
        %1607 = vmatprep.mubr.f32.mxu0 0.0
        %v1608 = vand.u32 %v1121, 4294901760
        %1609 = vmatmul.mubr.f32.gmra.mrb[0].mxu0 %v1608
        %v1610 = vpop.f32.mrb[0].mxu0
        %v1611 = vadd.f32 %v1512, %v1610
        %v1612 = vpop.f32.mrb[0].mxu0
        %1613 = vmatprep.mubr.f32.mxu0 0.0
        %v1614 = vand.u32 %v1124, 4294901760
        %1615 = vmatmul.mubr.f32.gmra.mrb[0].mxu0 %v1614
        %v1616 = vpop.f32.mrb[0].mxu0
        %v1617 = vadd.f32 %v1520, %v1616
        %v1618 = vpop.f32.mrb[0].mxu0
        %1619 = vmatprep.mubr.f32.mxu0 0.0
        %v1620 = vand.u32 %v1127, 4294901760
        %1621 = vmatmul.mubr.f32.gmra.mrb[0].mxu0 %v1620
        %v1622 = vpop.f32.mrb[0].mxu0
        %v1623 = vadd.f32 %v1528, %v1622
        %v1624 = vpop.f32.mrb[0].mxu0
        %1625 = vdwg.mxu0
        %1626 = vmatprep.subr.mxu0 0.0
        %v1627 = vand.u32 %v1115, 4294901760
        %1628 = vmatpush1.msra.mxu0 %v1627
        %1629 = vmatprep.subr.mxu0 0.0
        %v1630 = vand.u32 %v1116, 4294901760
        %1631 = vmatpush1.msra.mxu0 %v1630
        %1632 = vmatprep.subr.mxu0 0.0
        %1633 = vmatpush1.msra.mxu0 0.0
        %1634 = vmatprep.subr.mxu0 0.0
        %1635 = vmatpush1.msra.mxu0 0.0
        %1636 = vmatprep.subr.mxu0 0.0
        %1637 = vmatpush1.msra.mxu0 0.0
        %1638 = vmatprep.subr.mxu0 0.0
        %1639 = vmatpush1.msra.mxu0 0.0
        %1640 = vmatprep.subr.mxu0 0.0
        %1641 = vmatpush1.msra.mxu0 0.0
        %1642 = vmatprep.subr.mxu0 0.0
        %1643 = vmatpush1.msra.mxu0 0.0
        %1644 = vmatprep.subr.mxu0 0.0
        %1645 = vmatpush1.msra.mxu0 0.0
        %1646 = vmatprep.subr.mxu0 0.0
        %1647 = vmatpush1.msra.mxu0 0.0
        %1648 = vmatprep.subr.mxu0 0.0
        %1649 = vmatpush1.msra.mxu0 0.0
        %1650 = vmatprep.subr.mxu0 0.0
        %1651 = vmatpush1.msra.mxu0 0.0
        %1652 = vmatprep.subr.mxu0 0.0
        %1653 = vmatpush1.msra.mxu0 0.0
        %1654 = vmatprep.subr.mxu0 0.0
        %1655 = vmatpush1.msra.mxu0 0.0
        %1656 = vmatprep.subr.mxu0 0.0
        %1657 = vmatpush1.msra.mxu0 0.0
        %1658 = vmatprep.subr.mxu0 0.0
        %1659 = vmatpush1.msra.mxu0 0.0
        %1660 = vmatprep.subr.mxu0 0.0
        %1661 = vmatpush1.msra.mxu0 0.0
        %1662 = vmatprep.subr.mxu0 0.0
        %1663 = vmatpush1.msra.mxu0 0.0
        %1664 = vmatprep.subr.mxu0 0.0
        %1665 = vmatpush1.msra.mxu0 0.0
        %1666 = vmatprep.subr.mxu0 0.0
        %1667 = vmatpush1.msra.mxu0 0.0
        %1668 = vmatprep.subr.mxu0 0.0
        %1669 = vmatpush1.msra.mxu0 0.0
        %1670 = vmatprep.subr.mxu0 0.0
        %1671 = vmatpush1.msra.mxu0 0.0
        %1672 = vmatprep.subr.mxu0 0.0
        %1673 = vmatpush1.msra.mxu0 0.0
        %1674 = vmatprep.subr.mxu0 0.0
        %1675 = vmatpush1.msra.mxu0 0.0
        %1676 = vmatprep.subr.mxu0 0.0
        %1677 = vmatpush1.msra.mxu0 0.0
        %1678 = vmatprep.subr.mxu0 0.0
        %1679 = vmatpush1.msra.mxu0 0.0
        %1680 = vmatprep.subr.mxu0 0.0
        %1681 = vmatpush1.msra.mxu0 0.0
        %1682 = vmatprep.subr.mxu0 0.0
        %1683 = vmatpush1.msra.mxu0 0.0
        %1684 = vmatprep.subr.mxu0 0.0
        %1685 = vmatpush1.msra.mxu0 0.0
        %1686 = vmatprep.subr.mxu0 0.0
        %1687 = vmatpush1.msra.mxu0 0.0
        %1688 = vmatprep.subr.mxu0 0.0
        %1689 = vmatpush1.msra.mxu0 0.0
        %1690 = vmatprep.subr.mxu0 0.0
        %1691 = vmatpush1.msra.mxu0 0.0
        %1692 = vmatprep.mubr.f32.mxu0 0.0
        %v1693 = vand.u32 %v1118, 4294901760
        %1694 = vmatmul.mubr.f32.gmra.mrb[0].mxu0 %v1693
        %v1695 = vpop.f32.mrb[0].mxu0
        %v1696 = vadd.f32 %v1605, %v1695
        %v1697 = vpop.f32.mrb[0].mxu0
        %1698 = vmatprep.mubr.f32.mxu0 0.0
        %v1699 = vand.u32 %v1121, 4294901760
        %1700 = vmatmul.mubr.f32.gmra.mrb[0].mxu0 %v1699
        %v1701 = vpop.f32.mrb[0].mxu0
        %v1702 = vadd.f32 %v1611, %v1701
        %v1703 = vpop.f32.mrb[0].mxu0
        %1704 = vmatprep.mubr.f32.mxu0 0.0
        %v1705 = vand.u32 %v1124, 4294901760
        %1706 = vmatmul.mubr.f32.gmra.mrb[0].mxu0 %v1705
        %v1707 = vpop.f32.mrb[0].mxu0
        %v1708 = vadd.f32 %v1617, %v1707
        %v1709 = vpop.f32.mrb[0].mxu0
        %1710 = vmatprep.mubr.f32.mxu0 0.0
        %v1711 = vand.u32 %v1127, 4294901760
        %1712 = vmatmul.mubr.f32.gmra.mrb[0].mxu0 %v1711
        %v1713 = vpop.f32.mrb[0].mxu0
        %v1714 = vadd.f32 %v1623, %v1713
        %v1715 = vpop.f32.mrb[0].mxu0
        %1716 = vdwg.mxu0
        %1717 = vxpose.xlu0.b32.start [1/16] %v1696, 128
        %1718 = vxpose.xlu0.b32.cont [2/16] 0.0, 128
        %1719 = vxpose.xlu0.b32.cont [3/16] 0.0, 128
        %1720 = vxpose.xlu0.b32.cont [4/16] 0.0, 128
        %1721 = vxpose.xlu0.b32.cont [5/16] 0.0, 128
        %1722 = vxpose.xlu0.b32.cont [6/16] 0.0, 128
        %1723 = vxpose.xlu0.b32.cont [7/16] 0.0, 128
        %1724 = vxpose.xlu0.b32.cont [8/16] 0.0, 128
        %1725 = vxpose.xlu0.b32.cont [9/16] 0.0, 128
        %1726 = vxpose.xlu0.b32.cont [10/16] 0.0, 128
        %1727 = vxpose.xlu0.b32.cont [11/16] 0.0, 128
        %1728 = vxpose.xlu0.b32.cont [12/16] 0.0, 128
        %1729 = vxpose.xlu0.b32.cont [13/16] 0.0, 128
        %1730 = vxpose.xlu0.b32.cont [14/16] 0.0, 128
        %1731 = vxpose.xlu0.b32.cont [15/16] 0.0, 128
        %1732 = vxpose.xlu0.b32.end [16/16] 0.0, 128
        %v1733 = vpop.trf.xlu0
        %v1734 = vpop.trf.xlu0
        %v1735 = vpop.trf.xlu0
        %v1736 = vpop.trf.xlu0
        %v1737 = vpop.trf.xlu0
        %v1738 = vpop.trf.xlu0
        %v1739 = vpop.trf.xlu0
        %v1740 = vpop.trf.xlu0
        %v1741 = vpop.trf.xlu0
        %v1742 = vpop.trf.xlu0
        %v1743 = vpop.trf.xlu0
        %v1744 = vpop.trf.xlu0
        %v1745 = vpop.trf.xlu0
        %v1746 = vpop.trf.xlu0
        %v1747 = vpop.trf.xlu0
        %v1748 = vpop.trf.xlu0
        %1749 = vxpose.xlu0.b32.start [1/16] %v1702, 128
        %1750 = vxpose.xlu0.b32.cont [2/16] 0.0, 128
        %1751 = vxpose.xlu0.b32.cont [3/16] 0.0, 128
        %1752 = vxpose.xlu0.b32.cont [4/16] 0.0, 128
        %1753 = vxpose.xlu0.b32.cont [5/16] 0.0, 128
        %1754 = vxpose.xlu0.b32.cont [6/16] 0.0, 128
        %1755 = vxpose.xlu0.b32.cont [7/16] 0.0, 128
        %1756 = vxpose.xlu0.b32.cont [8/16] 0.0, 128
        %1757 = vxpose.xlu0.b32.cont [9/16] 0.0, 128
        %1758 = vxpose.xlu0.b32.cont [10/16] 0.0, 128
        %1759 = vxpose.xlu0.b32.cont [11/16] 0.0, 128
        %1760 = vxpose.xlu0.b32.cont [12/16] 0.0, 128
        %1761 = vxpose.xlu0.b32.cont [13/16] 0.0, 128
        %1762 = vxpose.xlu0.b32.cont [14/16] 0.0, 128
        %1763 = vxpose.xlu0.b32.cont [15/16] 0.0, 128
        %1764 = vxpose.xlu0.b32.end [16/16] 0.0, 128
        %v1765 = vpop.trf.xlu0
        %v1766 = vpop.trf.xlu0
        %v1767 = vpop.trf.xlu0
        %v1768 = vpop.trf.xlu0
        %v1769 = vpop.trf.xlu0
        %v1770 = vpop.trf.xlu0
        %v1771 = vpop.trf.xlu0
        %v1772 = vpop.trf.xlu0
        %v1773 = vpop.trf.xlu0
        %v1774 = vpop.trf.xlu0
        %v1775 = vpop.trf.xlu0
        %v1776 = vpop.trf.xlu0
        %v1777 = vpop.trf.xlu0
        %v1778 = vpop.trf.xlu0
        %v1779 = vpop.trf.xlu0
        %v1780 = vpop.trf.xlu0
        %1781 = vxpose.xlu0.b32.start [1/16] %v1708, 128
        %1782 = vxpose.xlu0.b32.cont [2/16] 0.0, 128
        %1783 = vxpose.xlu0.b32.cont [3/16] 0.0, 128
        %1784 = vxpose.xlu0.b32.cont [4/16] 0.0, 128
        %1785 = vxpose.xlu0.b32.cont [5/16] 0.0, 128
        %1786 = vxpose.xlu0.b32.cont [6/16] 0.0, 128
        %1787 = vxpose.xlu0.b32.cont [7/16] 0.0, 128
        %1788 = vxpose.xlu0.b32.cont [8/16] 0.0, 128
        %1789 = vxpose.xlu0.b32.cont [9/16] 0.0, 128
        %1790 = vxpose.xlu0.b32.cont [10/16] 0.0, 128
        %1791 = vxpose.xlu0.b32.cont [11/16] 0.0, 128
        %1792 = vxpose.xlu0.b32.cont [12/16] 0.0, 128
        %1793 = vxpose.xlu0.b32.cont [13/16] 0.0, 128
        %1794 = vxpose.xlu0.b32.cont [14/16] 0.0, 128
        %1795 = vxpose.xlu0.b32.cont [15/16] 0.0, 128
        %1796 = vxpose.xlu0.b32.end [16/16] 0.0, 128
        %v1797 = vpop.trf.xlu0
        %v1798 = vpop.trf.xlu0
        %v1799 = vpop.trf.xlu0
        %v1800 = vpop.trf.xlu0
        %v1801 = vpop.trf.xlu0
        %v1802 = vpop.trf.xlu0
        %v1803 = vpop.trf.xlu0
        %v1804 = vpop.trf.xlu0
        %v1805 = vpop.trf.xlu0
        %v1806 = vpop.trf.xlu0
        %v1807 = vpop.trf.xlu0
        %v1808 = vpop.trf.xlu0
        %v1809 = vpop.trf.xlu0
        %v1810 = vpop.trf.xlu0
        %v1811 = vpop.trf.xlu0
        %v1812 = vpop.trf.xlu0
        %1813 = vxpose.xlu0.b32.start [1/16] %v1714, 128
        %1814 = vxpose.xlu0.b32.cont [2/16] 0.0, 128
        %1815 = vxpose.xlu0.b32.cont [3/16] 0.0, 128
        %1816 = vxpose.xlu0.b32.cont [4/16] 0.0, 128
        %1817 = vxpose.xlu0.b32.cont [5/16] 0.0, 128
        %1818 = vxpose.xlu0.b32.cont [6/16] 0.0, 128
        %1819 = vxpose.xlu0.b32.cont [7/16] 0.0, 128
        %1820 = vxpose.xlu0.b32.cont [8/16] 0.0, 128
        %1821 = vxpose.xlu0.b32.cont [9/16] 0.0, 128
        %1822 = vxpose.xlu0.b32.cont [10/16] 0.0, 128
        %1823 = vxpose.xlu0.b32.cont [11/16] 0.0, 128
        %1824 = vxpose.xlu0.b32.cont [12/16] 0.0, 128
        %1825 = vxpose.xlu0.b32.cont [13/16] 0.0, 128
        %1826 = vxpose.xlu0.b32.cont [14/16] 0.0, 128
        %1827 = vxpose.xlu0.b32.cont [15/16] 0.0, 128
        %1828 = vxpose.xlu0.b32.end [16/16] 0.0, 128
        %v1829 = vpop.trf.xlu0
        %v1830 = vpop.trf.xlu0
        %v1831 = vpop.trf.xlu0
        %v1832 = vpop.trf.xlu0
        %v1833 = vpop.trf.xlu0
        %v1834 = vpop.trf.xlu0
        %v1835 = vpop.trf.xlu0
        %v1836 = vpop.trf.xlu0
        %v1837 = vpop.trf.xlu0
        %v1838 = vpop.trf.xlu0
        %v1839 = vpop.trf.xlu0
        %v1840 = vpop.trf.xlu0
        %v1841 = vpop.trf.xlu0
        %v1842 = vpop.trf.xlu0
        %v1843 = vpop.trf.xlu0
        %v1844 = vpop.trf.xlu0
        %vm1845 = vcmask 64512
        %1846 = vst.msk [vmem:[%s189] sm:$0xff] %vm1845, %v1733
        %1847 = vst.msk [vmem:[%s189 + $0x8] sm:$0xff] %vm1845, %v1765
        %1848 = vst.msk [vmem:[%s189 + $0x10] sm:$0xff] %vm1845, %v1797
        %1849 = vst.msk [vmem:[%s189 + $0x18] sm:$0xff] %vm1845, %v1829
        %s1850 = sand.u32 %s96, 1
        %s1851 = scalar_lea.sflag [#allocation4], %s1850
        %s1852 = sand.u32 %s96, 1
        %s1853 = smul.addr %s1852, 32
        %s1854 = scalar_lea.vmem [#allocation5], %s1853
        // Predicated region
        $region37: #{tpu_custom_call.1} parent=31 // pred_check
          %p1855 = pneg %p106
        $region38: #{tpu_custom_call.1} parent=31 // pred_check_branch
          %1857 = sbr.rel (%p1855) target = $region40
        $region39: #{tpu_custom_call.1} parent=31 // pred_region
          %s1858 = smul.u32 4, %s20
          %s1860 = ssub.s32 512, 512
          %1861 = vsyncadd %s1851, %s1860
          %s1862 = smul.addr %s1858, 128
          %s1863 = scalar_lea.hbm %s3, %s1862
          %s1864 = sshll.u32 %s1854, 4
          %s1865 = int_to_ptr.vmem [resolvable:$true] %s1864
          %1870 = dma.vmem_to_hbm [thread:$0]  %s1865, 512, %s1863, %s1851, 128, 128, 8
        $region40: #{tpu_custom_call.1} parent=31 // pred_fallthru
          _
      $region32: #{tpu_custom_call.1} parent=5 // pred_fallthru
        _
      %p1871 = scmp.le.s32.totalorder 2, %s15
      // Predicated region
      $region41: #{tpu_custom_call.1} parent=5 // pred_check
        %p1872 = pneg %p1871
      $region42: #{tpu_custom_call.1} parent=5 // pred_check_branch
        %1874 = sbr.rel (%p1872) target = $region44
      $region43: #{tpu_custom_call.1} parent=5 // pred_region
        %s1875 = ssub.s32 %s15, 2
        // Predicated region
        $region45: #{tpu_custom_call.1} parent=43 // pred_check
          %p1876 = pneg %p112
        $region46: #{tpu_custom_call.1} parent=43 // pred_check_branch
          %1878 = sbr.rel (%p1876) target = $region48
        $region47: #{tpu_custom_call.1} parent=43 // pred_region
          %s1879 = sand.u32 %s97, 1
          %s1880 = scalar_lea.sflag [#allocation4], %s1879
          %s1881 = sand.u32 %s97, 1
          %s1882 = smul.addr %s1881, 32
          %s1883 = scalar_lea.vmem [#allocation5], %s1882
          %1884 = dma.done %s1880, 512
        $region48: #{tpu_custom_call.1} parent=43 // pred_fallthru
          _
      $region44: #{tpu_custom_call.1} parent=5 // pred_fallthru
        _
    $region6: #{tpu_custom_call.1} parent=1 // loop_footer
      %s19 = sadd.s32 1, %s15
    $region7: #{tpu_custom_call.1} parent=1 // loop_footer_branch
      %14 = sbr.rel target = $region3
    $region8: #{tpu_custom_call.1} parent=1 // loop_exit
      _
    %1885 = vsyncpa [#allocation3], 1
    %s1886 = scalar_lea.sflag [#allocation3], 1
    %1887 = vsyncpa %s1886, 1
    %1888 = vsyncpa [#allocation4], 1
    %s1889 = scalar_lea.sflag [#allocation4], 1
    %1890 = vsyncpa %s1889, 1

</llo_original>
